<compile_context>
chip_gen: v6e
topology: v6e:2x2x1
jax: 0.10.0
libtpu: 0.0.40
codegen_flags: <defaults>
</compile_context>

<pallas_src>
import functools

import numpy as np

import jax
import jax.numpy as jnp
from jax import lax
from jax.experimental import pallas as pl
from jax.experimental.pallas import tpu as pltpu

# Finite stand-in for -inf: exp(_NEG - finite_max) underflows to exactly 0 in f32.
_NEG = -1e30


def _round_up(x, n):
    return ((x + n - 1) // n) * n


def _circle_loss_kernel(ii_ref, jj_ref,              # scalar-prefetch tile indices (SMEM)
                        feat_i_ref, feat_j_ref,      # (bt, Dp) feature row blocks
                        lab_i_ref, lab_j_ref,        # (bt, 1) / (1, bt) labels
                        stats_ref,                   # (1, 4, bt): [max_p, sum_p, max_n, sum_n]
                        *, m, gamma, bt, n_valid):
    t = pl.program_id(0)
    i = ii_ref[t]
    j = jj_ref[t]

    # Full-D contraction in one MXU call: contract the last dim of both operands
    # (q @ k^T form -> no per-tile transpose), accumulate in f32.
    sim = lax.dot_general(
        feat_i_ref[...], feat_j_ref[...],
        dimension_numbers=(((1,), (1,)), ((), ())),
        preferred_element_type=jnp.float32)                        # (bt, bt) f32

    # Strict upper triangle restricted to the un-padded batch, built from a
    # (bt,1) row-iota and a (1,bt) col-iota (broadcast happens in the compare).
    row_idx = i * bt + lax.broadcasted_iota(jnp.int32, (bt, 1), 0)
    col_idx = j * bt + lax.broadcasted_iota(jnp.int32, (1, bt), 1)
    triu = jnp.logical_and(col_idx > row_idx, col_idx < n_valid)   # (bt, bt)

    eq = lab_i_ref[...] == lab_j_ref[...]                          # (bt, bt)
    pos = jnp.logical_and(eq, triu)
    neg = jnp.logical_and(jnp.logical_not(eq), triu)

    ap = jnp.maximum((1.0 + m) - sim, 0.0)
    an = jnp.maximum(sim + m, 0.0)
    logit_p = (-gamma) * ap * (sim - (1.0 - m))
    logit_n = gamma * an * (sim - m)

    lp = jnp.where(pos, logit_p, _NEG)
    ln = jnp.where(neg, logit_n, _NEG)

    # Column-wise (sublane) partial reductions only; the cheap cross-tile
    # combine is done in the wrapper epilogue.
    mp = jnp.max(lp, axis=0, keepdims=True)                        # (1, bt)
    mn = jnp.max(ln, axis=0, keepdims=True)
    sp = jnp.sum(jnp.exp(lp - mp), axis=0, keepdims=True)
    sn = jnp.sum(jnp.exp(ln - mn), axis=0, keepdims=True)

    # One packed write per tile instead of four partial writebacks.
    stats_ref[...] = jnp.concatenate([mp, sp, mn, sn], axis=0).reshape(1, 4, bt)


def _combine_logsumexp(tile_max, tile_sumexp):
    """Combine per-column (max, sum-exp) partials into one logsumexp."""
    mx = tile_max.reshape(-1)
    sx = tile_sumexp.reshape(-1)
    g = jnp.max(mx)
    total = jnp.sum(sx * jnp.exp(mx - g))   # masked columns contribute exactly 0
    return g + jnp.log(total)


def circle_loss(feat, label, m=0.25, gamma=256.0, bt=256,
                compute_dtype=jnp.bfloat16):
    """feat: (B, D) L2-normalized features, label: (B,) int -> scalar f32 loss.

    bt: Gram-matrix row/col tile (multiple of 256 fills the v6e/v7x MXU).
    The full feature dim is contracted per tile (no K grid axis); per-tile VMEM
    is ~ 2 inputs x 2 buffers x bt x Dp x 2 bytes (bf16) -- fine for D <= ~4K.
    """
    B, D = feat.shape
    Bp = _round_up(B, bt)
    Dp = _round_up(D, 128)
    # NOTE: for very large D (>~4K) re-introduce a K grid axis + VMEM accumulator.

    # bf16 inputs halve DMA bytes / VMEM tiles; MXU accumulates in f32.
    feat_p = jnp.pad(feat.astype(compute_dtype), ((0, Bp - B), (0, Dp - D)))
    lab = jnp.pad(label.astype(jnp.int32), (0, Bp - B), constant_values=-1)
    lab_col = lab.reshape(Bp, 1)
    lab_row = lab.reshape(1, Bp)

    gi = Bp // bt
    # Enumerate ONLY the gi*(gi+1)/2 upper-triangular tile pairs.
    ii_np, jj_np = np.triu_indices(gi)
    ii = jnp.asarray(ii_np, dtype=jnp.int32)
    jj = jnp.asarray(jj_np, dtype=jnp.int32)
    num_tiles = int(ii_np.shape[0])

    # m/gamma baked in as constants (module hyperparameters); new values recompile.
    kernel = functools.partial(_circle_loss_kernel, m=float(m), gamma=float(gamma),
                               bt=bt, n_valid=B)

    grid_spec = pltpu.PrefetchScalarGridSpec(
        num_scalar_prefetch=2,
        grid=(num_tiles,),
        in_specs=[
            pl.BlockSpec((bt, Dp), lambda t, ii, jj: (ii[t], 0)),  # feat rows (tile i)
            pl.BlockSpec((bt, Dp), lambda t, ii, jj: (jj[t], 0)),  # feat rows (tile j)
            pl.BlockSpec((bt, 1), lambda t, ii, jj: (ii[t], 0)),   # labels for rows
            pl.BlockSpec((1, bt), lambda t, ii, jj: (0, jj[t])),   # labels for cols
        ],
        out_specs=pl.BlockSpec((1, 4, bt), lambda t, ii, jj: (t, 0, 0)),
    )

    stats = pl.pallas_call(
        kernel,
        out_shape=jax.ShapeDtypeStruct((num_tiles, 4, bt), jnp.float32),
        grid_spec=grid_spec,
        compiler_params=pltpu.CompilerParams(
            dimension_semantics=("parallel",),
            vmem_limit_bytes=32 * 1024 * 1024,  # > v5e 16 MiB default, <= v7x 64 MiB physical
        ),
    )(ii, jj, feat_p, feat_p, lab_col, lab_row)

    lse_p = _combine_logsumexp(stats[:, 0, :], stats[:, 1, :])
    lse_n = _combine_logsumexp(stats[:, 2, :], stats[:, 3, :])
    # NOTE: a batch with zero positive (or zero negative) pairs yields -inf here,
    # mirroring torch.logsumexp over an empty selection in the reference module.
    return jax.nn.softplus(lse_n + lse_p)


def _reference_circle_loss(feat, label, m=0.25, gamma=256.0):
    """Pure-JAX mirror of PyTorch CircleLoss.forward (masked logsumexp form)."""
    B = feat.shape[0]
    sim = jnp.dot(feat, feat.T, precision=jax.lax.Precision.HIGHEST)
    label_mat = label[:, None] == label[None, :]
    triu = jnp.triu(jnp.ones((B, B), dtype=bool), k=1)
    pos = jnp.logical_and(label_mat, triu)
    neg = jnp.logical_and(jnp.logical_not(label_mat), triu)
    ap = jnp.maximum(-sim + 1.0 + m, 0.0)
    an = jnp.maximum(sim + m, 0.0)
    logit_p = -ap * (sim - (1.0 - m)) * gamma
    logit_n = an * (sim - m) * gamma
    lse_p = jax.nn.logsumexp(jnp.where(pos, logit_p, -jnp.inf))
    lse_n = jax.nn.logsumexp(jnp.where(neg, logit_n, -jnp.inf))
    return jax.nn.softplus(lse_n + lse_p)


if __name__ == "__main__":
    key = jax.random.PRNGKey(0)
    k_feat, k_lab = jax.random.split(key)

    # Small but tiling-meaningful: Bp=512 -> gi=2 -> 3 upper-triangular tiles;
    # D=200 exercises feature padding (Dp=256).
    B, D = 500, 200
    feat = jax.random.normal(k_feat, (B, D), dtype=jnp.float32)
    feat = feat / jnp.linalg.norm(feat, axis=-1, keepdims=True)   # module expects normed features
    label = jax.random.randint(k_lab, (B,), 0, 8, dtype=jnp.int32)

    loss = circle_loss(feat, label, m=0.25, gamma=256.0, bt=256)
    loss = jax.block_until_ready(loss)

    ref = _reference_circle_loss(feat, label, 0.25, 256.0)
    # bf16 MXU inputs under gamma=256 amplification vs the f32 HIGHEST-precision
    # reference: documented tolerance of ~1% relative.
    assert jnp.allclose(loss, ref, rtol=1e-2, atol=1e-2), (loss, ref)

    print("KERNEL_OK")
</pallas_src>

<mosaic_0001>
module attributes {stable_mosaic.version = 11 : i64} {
  func.func @_circle_loss_kernel(%arg0: i32, %arg1: memref<3xi32, #tpu.memory_space<smem>>, %arg2: memref<3xi32, #tpu.memory_space<smem>>, %arg3: memref<256x256xbf16, #tpu.memory_space<vmem>>, %arg4: memref<256x256xbf16, #tpu.memory_space<vmem>>, %arg5: memref<256x1xi32, #tpu.memory_space<vmem>>, %arg6: memref<1x256xi32, #tpu.memory_space<vmem>>, %arg7: memref<1x4x256xf32, #tpu.memory_space<vmem>>) attributes {dimension_semantics = [#tpu.dimension_semantics<parallel>], iteration_bounds = array<i64: 3>, scalar_prefetch = 2 : i64, scratch_operands = 0 : i64, tpu.core_type = #tpu.core_type<tc>, window_params = [{transform_indices = @transform_0, window_bounds = array<i64: 256, 256>}, {transform_indices = @transform_1, window_bounds = array<i64: 256, 256>}, {transform_indices = @transform_2, window_bounds = array<i64: 256, 1>}, {transform_indices = @transform_3, window_bounds = array<i64: 1, 256>}, {transform_indices = @transform_4, window_bounds = array<i64: 1, 4, 256>}]} {
    %0 = arith.index_cast %arg0 : i32 to index
    %1 = memref.load %arg1[%0] : memref<3xi32, #tpu.memory_space<smem>>
    %2 = arith.index_cast %arg0 : i32 to index
    %3 = memref.load %arg2[%2] : memref<3xi32, #tpu.memory_space<smem>>
    %c0 = arith.constant 0 : index
    %c0_0 = arith.constant 0 : index
    %4 = vector.load %arg3[%c0, %c0_0] : memref<256x256xbf16, #tpu.memory_space<vmem>>, vector<256x256xbf16>
    %c0_1 = arith.constant 0 : index
    %c0_2 = arith.constant 0 : index
    %5 = vector.load %arg4[%c0_1, %c0_2] : memref<256x256xbf16, #tpu.memory_space<vmem>>, vector<256x256xbf16>
    %cst = arith.constant dense<0.000000e+00> : vector<256x256xf32>
    %6 = tpu.matmul %4, %5, %cst {dimension_numbers = #tpu.dot_dimension_numbers<[1], [1], [0], [0], [0, 0, 1, 0], [], []>} : vector<256x256xbf16>, vector<256x256xbf16>, vector<256x256xf32> -> vector<256x256xf32>
    %c256_i32 = arith.constant 256 : i32
    %7 = arith.muli %1, %c256_i32 : i32
    %8 = tpu.iota {dimensions = array<i32: 0>} : vector<256x1xi32>
    %9 = vector.broadcast %7 : i32 to vector<256x1xi32>
    %10 = arith.addi %9, %8 : vector<256x1xi32>
    %c256_i32_3 = arith.constant 256 : i32
    %11 = arith.muli %3, %c256_i32_3 : i32
    %12 = tpu.iota {dimensions = array<i32: 1>} : vector<1x256xi32>
    %13 = vector.broadcast %11 : i32 to vector<1x256xi32>
    %14 = arith.addi %13, %12 : vector<1x256xi32>
    %15 = vector.broadcast %14 : vector<1x256xi32> to vector<256x256xi32>
    %16 = vector.broadcast %10 : vector<256x1xi32> to vector<256x256xi32>
    %17 = arith.cmpi sgt, %15, %16 : vector<256x256xi32>
    %c500_i32 = arith.constant 500 : i32
    %18 = vector.broadcast %c500_i32 : i32 to vector<1x256xi32>
    %19 = arith.cmpi slt, %14, %18 : vector<1x256xi32>
    %20 = vector.broadcast %19 : vector<1x256xi1> to vector<256x256xi1>
    %21 = arith.andi %17, %20 : vector<256x256xi1>
    %c0_4 = arith.constant 0 : index
    %c0_5 = arith.constant 0 : index
    %22 = vector.load %arg5[%c0_4, %c0_5] : memref<256x1xi32, #tpu.memory_space<vmem>>, vector<256x1xi32>
    %c0_6 = arith.constant 0 : index
    %c0_7 = arith.constant 0 : index
    %23 = vector.load %arg6[%c0_6, %c0_7] : memref<1x256xi32, #tpu.memory_space<vmem>>, vector<1x256xi32>
    %24 = vector.broadcast %22 : vector<256x1xi32> to vector<256x256xi32>
    %25 = vector.broadcast %23 : vector<1x256xi32> to vector<256x256xi32>
    %26 = arith.cmpi eq, %24, %25 : vector<256x256xi32>
    %27 = arith.andi %26, %21 : vector<256x256xi1>
    %cst_8 = arith.constant dense<true> : vector<256x256xi1>
    %28 = arith.xori %26, %cst_8 : vector<256x256xi1>
    %29 = arith.andi %28, %21 : vector<256x256xi1>
    %cst_9 = arith.constant 1.250000e+00 : f32
    %30 = vector.broadcast %cst_9 : f32 to vector<256x256xf32>
    %31 = arith.subf %30, %6 : vector<256x256xf32>
    %cst_10 = arith.constant 0.000000e+00 : f32
    %32 = vector.broadcast %cst_10 : f32 to vector<256x256xf32>
    %33 = arith.maximumf %31, %32 : vector<256x256xf32>
    %cst_11 = arith.constant 2.500000e-01 : f32
    %34 = vector.broadcast %cst_11 : f32 to vector<256x256xf32>
    %35 = arith.addf %6, %34 : vector<256x256xf32>
    %cst_12 = arith.constant 0.000000e+00 : f32
    %36 = vector.broadcast %cst_12 : f32 to vector<256x256xf32>
    %37 = arith.maximumf %35, %36 : vector<256x256xf32>
    %cst_13 = arith.constant -2.560000e+02 : f32
    %38 = vector.broadcast %cst_13 : f32 to vector<256x256xf32>
    %39 = arith.mulf %38, %33 : vector<256x256xf32>
    %cst_14 = arith.constant 7.500000e-01 : f32
    %40 = vector.broadcast %cst_14 : f32 to vector<256x256xf32>
    %41 = arith.subf %6, %40 : vector<256x256xf32>
    %42 = arith.mulf %39, %41 : vector<256x256xf32>
    %cst_15 = arith.constant 2.560000e+02 : f32
    %43 = vector.broadcast %cst_15 : f32 to vector<256x256xf32>
    %44 = arith.mulf %43, %37 : vector<256x256xf32>
    %cst_16 = arith.constant 2.500000e-01 : f32
    %45 = vector.broadcast %cst_16 : f32 to vector<256x256xf32>
    %46 = arith.subf %6, %45 : vector<256x256xf32>
    %47 = arith.mulf %44, %46 : vector<256x256xf32>
    %cst_17 = arith.constant -1.000000e+30 : f32
    %48 = vector.broadcast %cst_17 : f32 to vector<256x256xf32>
    %49 = arith.select %27, %42, %48 : vector<256x256xi1>, vector<256x256xf32>
    %cst_18 = arith.constant -1.000000e+30 : f32
    %50 = vector.broadcast %cst_18 : f32 to vector<256x256xf32>
    %51 = arith.select %29, %47, %50 : vector<256x256xi1>, vector<256x256xf32>
    %cst_19 = arith.constant dense<0xFF800000> : vector<256xf32>
    %52 = vector.multi_reduction <maximumf>, %49, %cst_19 [0] : vector<256x256xf32> to vector<256xf32>
    %53 = vector.shape_cast %52 : vector<256xf32> to vector<1x256xf32>
    %cst_20 = arith.constant dense<0xFF800000> : vector<256xf32>
    %54 = vector.multi_reduction <maximumf>, %51, %cst_20 [0] : vector<256x256xf32> to vector<256xf32>
    %55 = vector.shape_cast %54 : vector<256xf32> to vector<1x256xf32>
    %56 = vector.broadcast %53 : vector<1x256xf32> to vector<256x256xf32>
    %57 = arith.subf %49, %56 : vector<256x256xf32>
    %58 = math.exp %57 : vector<256x256xf32>
    %cst_21 = arith.constant dense<0.000000e+00> : vector<256xf32>
    %59 = vector.multi_reduction <add>, %58, %cst_21 [0] : vector<256x256xf32> to vector<256xf32>
    %60 = vector.shape_cast %59 : vector<256xf32> to vector<1x256xf32>
    %61 = vector.broadcast %55 : vector<1x256xf32> to vector<256x256xf32>
    %62 = arith.subf %51, %61 : vector<256x256xf32>
    %63 = math.exp %62 : vector<256x256xf32>
    %cst_22 = arith.constant dense<0.000000e+00> : vector<256xf32>
    %64 = vector.multi_reduction <add>, %63, %cst_22 [0] : vector<256x256xf32> to vector<256xf32>
    %65 = vector.shape_cast %64 : vector<256xf32> to vector<1x256xf32>
    %66 = tpu.concatenate %53, %60, %55, %65 in 0 : vector<1x256xf32>, vector<1x256xf32>, vector<1x256xf32>, vector<1x256xf32> -> vector<4x256xf32>
    %67 = vector.shape_cast %66 : vector<4x256xf32> to vector<1x4x256xf32>
    %c0_23 = arith.constant 0 : index
    %c0_24 = arith.constant 0 : index
    %c0_25 = arith.constant 0 : index
    %68 = vector.load %arg7[%c0_23, %c0_24, %c0_25] : memref<1x4x256xf32, #tpu.memory_space<vmem>>, vector<1x4x256xf32>
    tpu.vector_store %arg7[%c0_23, %c0_24, %c0_25], %67 {strides = array<i32>} : memref<1x4x256xf32, #tpu.memory_space<vmem>>, vector<1x4x256xf32>,
    return
  }
  func.func @transform_0(%arg0: i32, %arg1: memref<3xi32, #tpu.memory_space<smem>>, %arg2: memref<3xi32, #tpu.memory_space<smem>>) -> (i32, i32) {
    %0 = arith.index_cast %arg0 : i32 to index
    %1 = memref.load %arg1[%0] : memref<3xi32, #tpu.memory_space<smem>>
    %c0_i32 = arith.constant 0 : i32
    %c0_i32_0 = arith.constant 0 : i32
    return %1, %c0_i32 : i32, i32
  }
  func.func @transform_1(%arg0: i32, %arg1: memref<3xi32, #tpu.memory_space<smem>>, %arg2: memref<3xi32, #tpu.memory_space<smem>>) -> (i32, i32) {
    %0 = arith.index_cast %arg0 : i32 to index
    %1 = memref.load %arg2[%0] : memref<3xi32, #tpu.memory_space<smem>>
    %c0_i32 = arith.constant 0 : i32
    %c0_i32_0 = arith.constant 0 : i32
    return %1, %c0_i32 : i32, i32
  }
  func.func @transform_2(%arg0: i32, %arg1: memref<3xi32, #tpu.memory_space<smem>>, %arg2: memref<3xi32, #tpu.memory_space<smem>>) -> (i32, i32) {
    %0 = arith.index_cast %arg0 : i32 to index
    %1 = memref.load %arg1[%0] : memref<3xi32, #tpu.memory_space<smem>>
    %c0_i32 = arith.constant 0 : i32
    %c0_i32_0 = arith.constant 0 : i32
    return %1, %c0_i32 : i32, i32
  }
  func.func @transform_3(%arg0: i32, %arg1: memref<3xi32, #tpu.memory_space<smem>>, %arg2: memref<3xi32, #tpu.memory_space<smem>>) -> (i32, i32) {
    %0 = arith.index_cast %arg0 : i32 to index
    %1 = memref.load %arg2[%0] : memref<3xi32, #tpu.memory_space<smem>>
    %c0_i32 = arith.constant 0 : i32
    %c0_i32_0 = arith.constant 0 : i32
    return %c0_i32, %1 : i32, i32
  }
  func.func @transform_4(%arg0: i32, %arg1: memref<3xi32, #tpu.memory_space<smem>>, %arg2: memref<3xi32, #tpu.memory_space<smem>>) -> (i32, i32, i32) {
    %c0_i32 = arith.constant 0 : i32
    %c0_i32_0 = arith.constant 0 : i32
    %c0_i32_1 = arith.constant 0 : i32
    return %arg0, %c0_i32, %c0_i32_0 : i32, i32, i32
  }
}

</mosaic_0001>

<llo_original>
// kernel: tpu_custom_call.1
$region0: #{tpu_custom_call.1}
  #allocation0 [shape = 'u32[]', space=smem, size = 0x4, offset = 0x4, fixed_abs, tag = 'smem constant byte address 0x4 - core index']
  #allocation1 [shape = 'u32[144,128]{1,0:T(1,128)}', space=vmem, size = 0x12000, scoped, tag = 'internal scratch']
  #allocation2 [shape = 's32[1]{0}', space=sflag, size = 0x4, scoped, tag = 'scoped memory for tpu_custom_call.1']
  #allocation3 [shape = 'u8[512]{0}', space=smem, size = 0x200, scoped, tag = 'prefetched SMEM operand 0']
  #allocation4 [shape = 'u8[512]{0}', space=smem, size = 0x200, scoped, tag = 'prefetched SMEM operand 1']
  %s0 = inlined_call_operand.vmem [shape: s32[3], index: 0, kind: input, shape index: {}]
  %s1 = inlined_call_operand.vmem [shape: s32[3], index: 1, kind: input, shape index: {}]
  %s2 = inlined_call_operand.vmem [shape: bf16[512,256], index: 2, kind: input, shape index: {}]
  %s3 = inlined_call_operand.hbm [shape: bf16[512,256], index: 3, kind: input, shape index: {}]
  %s4 = inlined_call_operand.vmem [shape: s32[512,1], index: 4, kind: input, shape index: {}]
  %s5 = inlined_call_operand.vmem [shape: s32[1,512], index: 5, kind: input, shape index: {}]
  %s6 = inlined_call_operand.hbm [shape: f32[3,4,256], index: 6, kind: output, shape index: {}]
  %s7 = sld [smem:[#allocation0]]
  $region53: #{tpu_custom_call.1} parent=0
    _
  %s9 = ssub.s32 1, %s7
  %s10 = scalar_select 0, %s9, %s7
  %s11 = sshll.u32 %s0, 4
  %s12 = int_to_ptr.vmem [resolvable:$true] %s11
  %14 = dma.vmem_to_smem %s12, 16, [#allocation3], [#allocation2]
  %s15 = sshll.u32 %s1, 4
  %s16 = int_to_ptr.vmem [resolvable:$true] %s15
  %18 = dma.vmem_to_smem %s16, 16, [#allocation4], [#allocation2]
  %19 = dma.done [#allocation2], 32
  %20 = sfence
  $region1: #{tpu_custom_call.1} parent=0
    #allocation5 [shape = 'u8[262144]{0}', space=vmem, size = 0x40000, scoped, tag = 'input window, operand 3']
    #allocation6 [shape = 's32[2]{0}', space=sflag, size = 0x8, scoped, tag = 'scoped memory for tpu_custom_call.1']
    #allocation7 [shape = 's32[2]{0}', space=sflag, size = 0x8, scoped, tag = 'scoped memory for tpu_custom_call.1']
    #allocation8 [shape = 'u8[8192]{0}', space=vmem, size = 0x2000, scoped, tag = 'output window, operand 0']
    %21 = vsyncpa [#allocation6], 0
    %s22 = scalar_lea.sflag [#allocation6], 1
    %23 = vsyncpa %s22, 0
    %24 = vsyncpa [#allocation7], 0
    %s25 = scalar_lea.sflag [#allocation7], 1
    %26 = vsyncpa %s25, 0
    loop: start=0, step=1, limit=5
    $region2: #{tpu_custom_call.1} parent=1 // loop_pre_header
      _
    $region3: #{tpu_custom_call.1} parent=1 // loop_header
      %s28 = sphi 0, %s32
      %p29 = scmp.ge.s32.totalorder %s28, 5
      %s40 = sphi 0, %s42
      %s43 = sphi 0, %s40
      %s44 = sphi 0, %s43
      %s60 = sphi 0, %s44
      %s68 = sphi 0, %s70
      %s71 = sphi 0, %s68
      %s72 = sphi 0, %s71
      %s88 = sphi 0, %s72
      %s96 = sphi 0, %s98
      %s99 = sphi 0, %s96
      %s100 = sphi 0, %s99
      %s116 = sphi 0, %s100
      %s124 = sphi 0, %s126
      %s127 = sphi 0, %s124
      %s128 = sphi 0, %s127
      %s144 = sphi 0, %s128
      %s150 = sphi 0, %s152
      %s153 = sphi 0, %s150
      %s154 = sphi 0, %s153
      %s170 = sphi 0, %s154
    $region4: #{tpu_custom_call.1} parent=1 // loop_header_branch
      %31 = sbr.rel (%p29) target = $region8
    $region5: #{tpu_custom_call.1} parent=1 // loop_body
      %s33 = ssub.s32 %s28, 1
      %s34 = ssub.s32 %s28, 2
      %s35 = sadd.s32 %s28, 1
      %s36 = sld [smem:[#allocation3 + %s28]]
      %s37 = sld [smem:[#allocation3 + %s35]]
      %s38 = ssub.s32 %s36, %s37
      %p39 = scmp.eq.s32.totalorder %s38, 0
      %s41 = sadd.s32 %s40, 1
      %s42 = scalar_select %p39, %s40, %s41
      %p45 = pneg %p39
      %p46 = scmp.eq.s32.totalorder %s28, 2
      %p47 = por %p45, %p46
      %p48 = scmp.ne.s32.totalorder %s40, %s43
      %p49 = scmp.eq.s32.totalorder %s28, 0
      %p50 = por %p48, %p49
      %p51 = scmp.ne.s32.totalorder %s40, %s43
      %p52 = scmp.eq.s32.totalorder %s33, 2
      %p53 = por %p51, %p52
      %p54 = scmp.ne.s32.totalorder %s43, %s44
      %p55 = scmp.eq.s32.totalorder %s33, 0
      %p56 = por %p54, %p55
      %p57 = scmp.ne.s32.totalorder %s43, %s44
      %p58 = scmp.eq.s32.totalorder %s34, 2
      %p59 = por %p57, %p58
      %p61 = scmp.ne.s32.totalorder %s44, %s60
      %p62 = scmp.eq.s32.totalorder %s34, 0
      %p63 = por %p61, %p62
      %s64 = sld [smem:[#allocation4 + %s28]]
      %s65 = sld [smem:[#allocation4 + %s35]]
      %s66 = ssub.s32 %s64, %s65
      %p67 = scmp.eq.s32.totalorder %s66, 0
      %s69 = sadd.s32 %s68, 1
      %s70 = scalar_select %p67, %s68, %s69
      %p73 = pneg %p67
      %p74 = scmp.eq.s32.totalorder %s28, 2
      %p75 = por %p73, %p74
      %p76 = scmp.ne.s32.totalorder %s68, %s71
      %p77 = scmp.eq.s32.totalorder %s28, 0
      %p78 = por %p76, %p77
      %p79 = scmp.ne.s32.totalorder %s68, %s71
      %p80 = scmp.eq.s32.totalorder %s33, 2
      %p81 = por %p79, %p80
      %p82 = scmp.ne.s32.totalorder %s71, %s72
      %p83 = scmp.eq.s32.totalorder %s33, 0
      %p84 = por %p82, %p83
      %p85 = scmp.ne.s32.totalorder %s71, %s72
      %p86 = scmp.eq.s32.totalorder %s34, 2
      %p87 = por %p85, %p86
      %p89 = scmp.ne.s32.totalorder %s72, %s88
      %p90 = scmp.eq.s32.totalorder %s34, 0
      %p91 = por %p89, %p90
      %s92 = sld [smem:[#allocation3 + %s28]]
      %s93 = sld [smem:[#allocation3 + %s35]]
      %s94 = ssub.s32 %s92, %s93
      %p95 = scmp.eq.s32.totalorder %s94, 0
      %s97 = sadd.s32 %s96, 1
      %s98 = scalar_select %p95, %s96, %s97
      %p101 = pneg %p95
      %p102 = scmp.eq.s32.totalorder %s28, 2
      %p103 = por %p101, %p102
      %p104 = scmp.ne.s32.totalorder %s96, %s99
      %p105 = scmp.eq.s32.totalorder %s28, 0
      %p106 = por %p104, %p105
      %p107 = scmp.ne.s32.totalorder %s96, %s99
      %p108 = scmp.eq.s32.totalorder %s33, 2
      %p109 = por %p107, %p108
      %p110 = scmp.ne.s32.totalorder %s99, %s100
      %p111 = scmp.eq.s32.totalorder %s33, 0
      %p112 = por %p110, %p111
      %p113 = scmp.ne.s32.totalorder %s99, %s100
      %p114 = scmp.eq.s32.totalorder %s34, 2
      %p115 = por %p113, %p114
      %p117 = scmp.ne.s32.totalorder %s100, %s116
      %p118 = scmp.eq.s32.totalorder %s34, 0
      %p119 = por %p117, %p118
      %s120 = sld [smem:[#allocation4 + %s28]]
      %s121 = sld [smem:[#allocation4 + %s35]]
      %s122 = ssub.s32 %s120, %s121
      %p123 = scmp.eq.s32.totalorder %s122, 0
      %s125 = sadd.s32 %s124, 1
      %s126 = scalar_select %p123, %s124, %s125
      %p129 = pneg %p123
      %p130 = scmp.eq.s32.totalorder %s28, 2
      %p131 = por %p129, %p130
      %p132 = scmp.ne.s32.totalorder %s124, %s127
      %p133 = scmp.eq.s32.totalorder %s28, 0
      %p134 = por %p132, %p133
      %p135 = scmp.ne.s32.totalorder %s124, %s127
      %p136 = scmp.eq.s32.totalorder %s33, 2
      %p137 = por %p135, %p136
      %p138 = scmp.ne.s32.totalorder %s127, %s128
      %p139 = scmp.eq.s32.totalorder %s33, 0
      %p140 = por %p138, %p139
      %p141 = scmp.ne.s32.totalorder %s127, %s128
      %p142 = scmp.eq.s32.totalorder %s34, 2
      %p143 = por %p141, %p142
      %p145 = scmp.ne.s32.totalorder %s128, %s144
      %p146 = scmp.eq.s32.totalorder %s34, 0
      %p147 = por %p145, %p146
      %s148 = ssub.s32 %s28, %s35
      %p149 = scmp.eq.s32.totalorder %s148, 0
      %s151 = sadd.s32 %s150, 1
      %s152 = scalar_select %p149, %s150, %s151
      %p155 = pneg %p149
      %p156 = scmp.eq.s32.totalorder %s28, 2
      %p157 = por %p155, %p156
      %p158 = scmp.ne.s32.totalorder %s150, %s153
      %p159 = scmp.eq.s32.totalorder %s28, 0
      %p160 = por %p158, %p159
      %p161 = scmp.ne.s32.totalorder %s150, %s153
      %p162 = scmp.eq.s32.totalorder %s33, 2
      %p163 = por %p161, %p162
      %p164 = scmp.ne.s32.totalorder %s153, %s154
      %p165 = scmp.eq.s32.totalorder %s33, 0
      %p166 = por %p164, %p165
      %p167 = scmp.ne.s32.totalorder %s153, %s154
      %p168 = scmp.eq.s32.totalorder %s34, 2
      %p169 = por %p167, %p168
      %p171 = scmp.ne.s32.totalorder %s154, %s170
      %p172 = scmp.eq.s32.totalorder %s34, 0
      %p173 = por %p171, %p172
      %p174 = scmp.le.s32.totalorder 1, %s28
      %p175 = scmp.lt.s32.totalorder %s28, 4
      %p176 = pnand %p174, %p175
      %p177 = pneg %p176
      // Predicated region
      $region9: #{tpu_custom_call.1} parent=5 // pred_check
        _
      $region10: #{tpu_custom_call.1} parent=5 // pred_check_branch
        %179 = sbr.rel (%p176) target = $region12
      $region11: #{tpu_custom_call.1} parent=5 // pred_region
        %s180 = ssub.s32 %s28, 1
      $region12: #{tpu_custom_call.1} parent=5 // pred_fallthru
        _
      %p181 = scmp.lt.s32.totalorder %s28, 3
      // Predicated region
      $region13: #{tpu_custom_call.1} parent=5 // pred_check
        %p182 = pneg %p181
      $region14: #{tpu_custom_call.1} parent=5 // pred_check_branch
        %184 = sbr.rel (%p182) target = $region16
      $region15: #{tpu_custom_call.1} parent=5 // pred_region
        // Predicated region
        $region17: #{tpu_custom_call.1} parent=15 // pred_check
          %p185 = pneg %p50
        $region18: #{tpu_custom_call.1} parent=15 // pred_check_branch
          %187 = sbr.rel (%p185) target = $region20
        $region19: #{tpu_custom_call.1} parent=15 // pred_region
          %s188 = sld [smem:[#allocation3 + %s28]]
          %s189 = smul.u32 32, %s188
          %p190 = scmp.lt.s32.totalorder %s189, 63
          %s191 = scalar_select %p190, %s189, 63
          %s192 = smul.addr %s191, 2
          %s193 = smul.addr %s192, 4
          %s194 = scalar_lea.vmem %s2, %s193
          %s195 = sld [smem:[#allocation3 + %s28]]
          %s196 = smul.u32 32, %s195
        $region20: #{tpu_custom_call.1} parent=15 // pred_fallthru
          _
        // Predicated region
        $region21: #{tpu_custom_call.1} parent=15 // pred_check
          %p197 = pneg %p78
        $region22: #{tpu_custom_call.1} parent=15 // pred_check_branch
          %199 = sbr.rel (%p197) target = $region24
        $region23: #{tpu_custom_call.1} parent=15 // pred_region
          %s200 = sand.u32 %s68, 1
          %s201 = scalar_lea.sflag [#allocation6], %s200
          %s202 = sand.u32 %s68, 1
          %s203 = smul.addr %s202, 256
          %s204 = scalar_lea.vmem [#allocation5], %s203
          %s205 = sld [smem:[#allocation4 + %s28]]
          %s206 = smul.u32 32, %s205
          %s208 = ssub.s32 4096, 4096
          %209 = vsyncadd %s201, %s208
          %s210 = smul.addr %s206, 2
          %s211 = smul.addr %s210, 64
          %s212 = scalar_lea.hbm %s3, %s211
          %s213 = sshll.u32 %s204, 4
          %s214 = int_to_ptr.vmem [resolvable:$true] %s213
          %219 = dma.hbm_to_vmem [thread:$0]  %s212, 4096, %s214, %s201, 128, 128, 8
        $region24: #{tpu_custom_call.1} parent=15 // pred_fallthru
          _
        // Predicated region
        $region25: #{tpu_custom_call.1} parent=15 // pred_check
          %p220 = pneg %p106
        $region26: #{tpu_custom_call.1} parent=15 // pred_check_branch
          %222 = sbr.rel (%p220) target = $region28
        $region27: #{tpu_custom_call.1} parent=15 // pred_region
          %s223 = sld [smem:[#allocation3 + %s28]]
          %s224 = smul.u32 32, %s223
          %p225 = scmp.lt.s32.totalorder %s224, 63
          %s226 = scalar_select %p225, %s224, 63
          %s227 = smul.addr %s226, 8
          %s228 = scalar_lea.vmem %s4, %s227
          %s229 = sld [smem:[#allocation3 + %s28]]
          %s230 = smul.u32 32, %s229
        $region28: #{tpu_custom_call.1} parent=15 // pred_fallthru
          _
        // Predicated region
        $region29: #{tpu_custom_call.1} parent=15 // pred_check
          %p231 = pneg %p134
        $region30: #{tpu_custom_call.1} parent=15 // pred_check_branch
          %233 = sbr.rel (%p231) target = $region32
        $region31: #{tpu_custom_call.1} parent=15 // pred_region
          %s234 = sld [smem:[#allocation4 + %s28]]
          %s235 = smul.u32 2, %s234
          %p236 = scmp.lt.s32.totalorder %s235, 3
          %s237 = scalar_select %p236, %s235, 3
          %s238 = scalar_lea.vmem %s5, %s237
          %s239 = sld [smem:[#allocation4 + %s28]]
          %s240 = smul.u32 2, %s239
        $region32: #{tpu_custom_call.1} parent=15 // pred_fallthru
          _
      $region16: #{tpu_custom_call.1} parent=5 // pred_fallthru
        _
      %p241 = scmp.le.s32.totalorder 1, %s28
      %p242 = scmp.lt.s32.totalorder %s28, 4
      %p243 = pnand %p241, %p242
      %p244 = pneg %p243
      // Predicated region
      $region33: #{tpu_custom_call.1} parent=5 // pred_check
        _
      $region34: #{tpu_custom_call.1} parent=5 // pred_check_branch
        %246 = sbr.rel (%p243) target = $region36
      $region35: #{tpu_custom_call.1} parent=5 // pred_region
        %s247 = ssub.s32 %s28, 1
        %s248 = sand.u32 %s71, 1
        %s249 = scalar_lea.sflag [#allocation6], %s248
        %s250 = sand.u32 %s71, 1
        %s251 = smul.addr %s250, 256
        %s252 = scalar_lea.vmem [#allocation5], %s251
        // Predicated region
        $region37: #{tpu_custom_call.1} parent=35 // pred_check
          %p253 = pneg %p84
        $region38: #{tpu_custom_call.1} parent=35 // pred_check_branch
          %255 = sbr.rel (%p253) target = $region40
        $region39: #{tpu_custom_call.1} parent=35 // pred_region
          %256 = dma.done %s249, 4096
        $region40: #{tpu_custom_call.1} parent=35 // pred_fallthru
          _
        %s257 = sld [smem:[#allocation3 + %s33]]
        %s258 = smul.u32 32, %s257
        %p259 = scmp.lt.s32.totalorder %s258, 63
        %s260 = scalar_select %p259, %s258, 63
        %s261 = smul.addr %s260, 2
        %s262 = smul.addr %s261, 4
        %s263 = scalar_lea.vmem %s2, %s262
        %p264 = pneg %p56
        %p265 = pneg %p53
        %s266 = sand.u32 %s71, 1
        %s267 = scalar_lea.sflag [#allocation6], %s266
        %s268 = sand.u32 %s71, 1
        %s269 = smul.addr %s268, 256
        %s270 = scalar_lea.vmem [#allocation5], %s269
        %p271 = pneg %p84
        %p272 = pneg %p81
        %s273 = sld [smem:[#allocation3 + %s33]]
        %s274 = smul.u32 32, %s273
        %p275 = scmp.lt.s32.totalorder %s274, 63
        %s276 = scalar_select %p275, %s274, 63
        %s277 = smul.addr %s276, 8
        %s278 = scalar_lea.vmem %s4, %s277
        %p279 = pneg %p112
        %p280 = pneg %p109
        %s281 = sld [smem:[#allocation4 + %s33]]
        %s282 = smul.u32 2, %s281
        %p283 = scmp.lt.s32.totalorder %s282, 3
        %s284 = scalar_select %p283, %s282, 3
        %s285 = scalar_lea.vmem %s5, %s284
        %p286 = pneg %p140
        %p287 = pneg %p137
        %p288 = pneg %p166
        %p289 = pneg %p163
        %s290 = sand.u32 %s153, 1
        %s291 = scalar_lea.sflag [#allocation7], %s290
        %s292 = sand.u32 %s153, 1
        %s293 = smul.addr %s292, 8
        %s294 = scalar_lea.vmem [#allocation8], %s293
        %s295 = sld [smem:[#allocation3 + %s33]]
        %s296 = smul.u32 32, %s295
        %p297 = scmp.lt.s32.totalorder %s296, 63
        %s298 = scalar_select %p297, %s296, 63
        %s299 = smul.addr %s298, 2
        %s300 = smul.addr %s299, 4
        %s301 = scalar_lea.vmem %s2, %s300
        %s302 = sld [smem:[#allocation3 + %s33]]
        %s303 = smul.u32 32, %s302
        %s304 = sld [smem:[#allocation4 + %s33]]
        %s305 = smul.u32 32, %s304
        %s306 = sld [smem:[#allocation3 + %s33]]
        %s307 = smul.u32 32, %s306
        %p308 = scmp.lt.s32.totalorder %s307, 63
        %s309 = scalar_select %p308, %s307, 63
        %s310 = smul.addr %s309, 8
        %s311 = scalar_lea.vmem %s4, %s310
        %s312 = sld [smem:[#allocation3 + %s33]]
        %s313 = smul.u32 32, %s312
        %s314 = sld [smem:[#allocation4 + %s33]]
        %s315 = smul.u32 2, %s314
        %p316 = scmp.lt.s32.totalorder %s315, 3
        %s317 = scalar_select %p316, %s315, 3
        %s318 = scalar_lea.vmem %s5, %s317
        %s319 = sld [smem:[#allocation4 + %s33]]
        %s320 = smul.u32 2, %s319
        %s321 = sld [smem:[#allocation3 + %s33]]
        %s322 = sld [smem:[#allocation4 + %s33]]
        %v323 = vld [vmem:[%s301] sm:$0xff]
        %v324 = vld [vmem:[%s301 + $0x8] sm:$0xff]
        %v325 = vld [vmem:[%s301 + $0x10] sm:$0xff]
        %v326 = vld [vmem:[%s301 + $0x18] sm:$0xff]
        %v327 = vld [vmem:[%s301 + $0x20] sm:$0xff]
        %v328 = vld [vmem:[%s301 + $0x28] sm:$0xff]
        %v329 = vld [vmem:[%s301 + $0x30] sm:$0xff]
        %v330 = vld [vmem:[%s301 + $0x38] sm:$0xff]
        %v331 = vld [vmem:[%s301 + $0x40] sm:$0xff]
        %v332 = vld [vmem:[%s301 + $0x48] sm:$0xff]
        %v333 = vld [vmem:[%s301 + $0x50] sm:$0xff]
        %v334 = vld [vmem:[%s301 + $0x58] sm:$0xff]
        %v335 = vld [vmem:[%s301 + $0x60] sm:$0xff]
        %v336 = vld [vmem:[%s301 + $0x68] sm:$0xff]
        %v337 = vld [vmem:[%s301 + $0x70] sm:$0xff]
        %v338 = vld [vmem:[%s301 + $0x78] sm:$0xff]
        %v339 = vld [vmem:[%s301 + $0x80] sm:$0xff]
        %v340 = vld [vmem:[%s301 + $0x88] sm:$0xff]
        %v341 = vld [vmem:[%s301 + $0x90] sm:$0xff]
        %v342 = vld [vmem:[%s301 + $0x98] sm:$0xff]
        %v343 = vld [vmem:[%s301 + $0xa0] sm:$0xff]
        %v344 = vld [vmem:[%s301 + $0xa8] sm:$0xff]
        %v345 = vld [vmem:[%s301 + $0xb0] sm:$0xff]
        %v346 = vld [vmem:[%s301 + $0xb8] sm:$0xff]
        %v347 = vld [vmem:[%s301 + $0xc0] sm:$0xff]
        %v348 = vld [vmem:[%s301 + $0xc8] sm:$0xff]
        %v349 = vld [vmem:[%s301 + $0xd0] sm:$0xff]
        %v350 = vld [vmem:[%s301 + $0xd8] sm:$0xff]
        %v351 = vld [vmem:[%s301 + $0xe0] sm:$0xff]
        %v352 = vld [vmem:[%s301 + $0xe8] sm:$0xff]
        %v353 = vld [vmem:[%s301 + $0xf0] sm:$0xff]
        %v354 = vld [vmem:[%s301 + $0xf8] sm:$0xff]
        %v355 = vld [vmem:[%s252] sm:$0xff]
        %v356 = vld [vmem:[%s252 + $0x8] sm:$0xff]
        %v357 = vld [vmem:[%s252 + $0x10] sm:$0xff]
        %v358 = vld [vmem:[%s252 + $0x18] sm:$0xff]
        %v359 = vld [vmem:[%s252 + $0x20] sm:$0xff]
        %v360 = vld [vmem:[%s252 + $0x28] sm:$0xff]
        %v361 = vld [vmem:[%s252 + $0x30] sm:$0xff]
        %v362 = vld [vmem:[%s252 + $0x38] sm:$0xff]
        %v363 = vld [vmem:[%s252 + $0x40] sm:$0xff]
        %v364 = vld [vmem:[%s252 + $0x48] sm:$0xff]
        %v365 = vld [vmem:[%s252 + $0x50] sm:$0xff]
        %v366 = vld [vmem:[%s252 + $0x58] sm:$0xff]
        %v367 = vld [vmem:[%s252 + $0x60] sm:$0xff]
        %v368 = vld [vmem:[%s252 + $0x68] sm:$0xff]
        %v369 = vld [vmem:[%s252 + $0x70] sm:$0xff]
        %v370 = vld [vmem:[%s252 + $0x78] sm:$0xff]
        %v371 = vld [vmem:[%s252 + $0x80] sm:$0xff]
        %v372 = vld [vmem:[%s252 + $0x88] sm:$0xff]
        %v373 = vld [vmem:[%s252 + $0x90] sm:$0xff]
        %v374 = vld [vmem:[%s252 + $0x98] sm:$0xff]
        %v375 = vld [vmem:[%s252 + $0xa0] sm:$0xff]
        %v376 = vld [vmem:[%s252 + $0xa8] sm:$0xff]
        %v377 = vld [vmem:[%s252 + $0xb0] sm:$0xff]
        %v378 = vld [vmem:[%s252 + $0xb8] sm:$0xff]
        %v379 = vld [vmem:[%s252 + $0xc0] sm:$0xff]
        %v380 = vld [vmem:[%s252 + $0xc8] sm:$0xff]
        %v381 = vld [vmem:[%s252 + $0xd0] sm:$0xff]
        %v382 = vld [vmem:[%s252 + $0xd8] sm:$0xff]
        %v383 = vld [vmem:[%s252 + $0xe0] sm:$0xff]
        %v384 = vld [vmem:[%s252 + $0xe8] sm:$0xff]
        %v385 = vld [vmem:[%s252 + $0xf0] sm:$0xff]
        %v386 = vld [vmem:[%s252 + $0xf8] sm:$0xff]
        %v419 = vunpack.c.l.b16 %v323
        %v420 = vunpack.c.h.b16 %v323
        %v421 = vunpack.c.l.b16 %v324
        %v422 = vunpack.c.h.b16 %v324
        %v423 = vunpack.c.l.b16 %v325
        %v424 = vunpack.c.h.b16 %v325
        %v425 = vunpack.c.l.b16 %v326
        %v426 = vunpack.c.h.b16 %v326
        %v427 = vunpack.c.l.b16 %v327
        %v428 = vunpack.c.h.b16 %v327
        %v429 = vunpack.c.l.b16 %v328
        %v430 = vunpack.c.h.b16 %v328
        %v431 = vunpack.c.l.b16 %v329
        %v432 = vunpack.c.h.b16 %v329
        %v433 = vunpack.c.l.b16 %v330
        %v434 = vunpack.c.h.b16 %v330
        %v435 = vunpack.c.l.b16 %v331
        %v436 = vunpack.c.h.b16 %v331
        %v437 = vunpack.c.l.b16 %v332
        %v438 = vunpack.c.h.b16 %v332
        %v439 = vunpack.c.l.b16 %v333
        %v440 = vunpack.c.h.b16 %v333
        %v441 = vunpack.c.l.b16 %v334
        %v442 = vunpack.c.h.b16 %v334
        %v443 = vunpack.c.l.b16 %v335
        %v444 = vunpack.c.h.b16 %v335
        %v445 = vunpack.c.l.b16 %v336
        %v446 = vunpack.c.h.b16 %v336
        %v447 = vunpack.c.l.b16 %v337
        %v448 = vunpack.c.h.b16 %v337
        %v449 = vunpack.c.l.b16 %v338
        %v450 = vunpack.c.h.b16 %v338
        %v451 = vunpack.c.l.b16 %v339
        %v452 = vunpack.c.h.b16 %v339
        %v453 = vunpack.c.l.b16 %v340
        %v454 = vunpack.c.h.b16 %v340
        %v455 = vunpack.c.l.b16 %v341
        %v456 = vunpack.c.h.b16 %v341
        %v457 = vunpack.c.l.b16 %v342
        %v458 = vunpack.c.h.b16 %v342
        %v459 = vunpack.c.l.b16 %v343
        %v460 = vunpack.c.h.b16 %v343
        %v461 = vunpack.c.l.b16 %v344
        %v462 = vunpack.c.h.b16 %v344
        %v463 = vunpack.c.l.b16 %v345
        %v464 = vunpack.c.h.b16 %v345
        %v465 = vunpack.c.l.b16 %v346
        %v466 = vunpack.c.h.b16 %v346
        %v467 = vunpack.c.l.b16 %v347
        %v468 = vunpack.c.h.b16 %v347
        %v469 = vunpack.c.l.b16 %v348
        %v470 = vunpack.c.h.b16 %v348
        %v471 = vunpack.c.l.b16 %v349
        %v472 = vunpack.c.h.b16 %v349
        %v473 = vunpack.c.l.b16 %v350
        %v474 = vunpack.c.h.b16 %v350
        %v475 = vunpack.c.l.b16 %v351
        %v476 = vunpack.c.h.b16 %v351
        %v477 = vunpack.c.l.b16 %v352
        %v478 = vunpack.c.h.b16 %v352
        %v479 = vunpack.c.l.b16 %v353
        %v480 = vunpack.c.h.b16 %v353
        %v481 = vunpack.c.l.b16 %v354
        %v482 = vunpack.c.h.b16 %v354
        %v483 = vpack.c.b16 %v421, %v419
        %v484 = vpack.c.b16 %v422, %v420
        %v485 = vpack.c.b16 %v425, %v423
        %v486 = vpack.c.b16 %v426, %v424
        %v487 = vpack.c.b16 %v429, %v427
        %v488 = vpack.c.b16 %v430, %v428
        %v489 = vpack.c.b16 %v433, %v431
        %v490 = vpack.c.b16 %v434, %v432
        %v491 = vpack.c.b16 %v437, %v435
        %v492 = vpack.c.b16 %v438, %v436
        %v493 = vpack.c.b16 %v441, %v439
        %v494 = vpack.c.b16 %v442, %v440
        %v495 = vpack.c.b16 %v445, %v443
        %v496 = vpack.c.b16 %v446, %v444
        %v497 = vpack.c.b16 %v449, %v447
        %v498 = vpack.c.b16 %v450, %v448
        %v499 = vpack.c.b16 %v453, %v451
        %v500 = vpack.c.b16 %v454, %v452
        %v501 = vpack.c.b16 %v457, %v455
        %v502 = vpack.c.b16 %v458, %v456
        %v503 = vpack.c.b16 %v461, %v459
        %v504 = vpack.c.b16 %v462, %v460
        %v505 = vpack.c.b16 %v465, %v463
        %v506 = vpack.c.b16 %v466, %v464
        %v507 = vpack.c.b16 %v469, %v467
        %v508 = vpack.c.b16 %v470, %v468
        %v509 = vpack.c.b16 %v473, %v471
        %v510 = vpack.c.b16 %v474, %v472
        %v511 = vpack.c.b16 %v477, %v475
        %v512 = vpack.c.b16 %v478, %v476
        %v513 = vpack.c.b16 %v481, %v479
        %v514 = vpack.c.b16 %v482, %v480
        %v579 = vunpack.c.l.b16 %v355
        %v580 = vunpack.c.h.b16 %v355
        %v581 = vunpack.c.l.b16 %v356
        %v582 = vunpack.c.h.b16 %v356
        %v583 = vunpack.c.l.b16 %v357
        %v584 = vunpack.c.h.b16 %v357
        %v585 = vunpack.c.l.b16 %v358
        %v586 = vunpack.c.h.b16 %v358
        %v587 = vunpack.c.l.b16 %v359
        %v588 = vunpack.c.h.b16 %v359
        %v589 = vunpack.c.l.b16 %v360
        %v590 = vunpack.c.h.b16 %v360
        %v591 = vunpack.c.l.b16 %v361
        %v592 = vunpack.c.h.b16 %v361
        %v593 = vunpack.c.l.b16 %v362
        %v594 = vunpack.c.h.b16 %v362
        %v595 = vunpack.c.l.b16 %v363
        %v596 = vunpack.c.h.b16 %v363
        %v597 = vunpack.c.l.b16 %v364
        %v598 = vunpack.c.h.b16 %v364
        %v599 = vunpack.c.l.b16 %v365
        %v600 = vunpack.c.h.b16 %v365
        %v601 = vunpack.c.l.b16 %v366
        %v602 = vunpack.c.h.b16 %v366
        %v603 = vunpack.c.l.b16 %v367
        %v604 = vunpack.c.h.b16 %v367
        %v605 = vunpack.c.l.b16 %v368
        %v606 = vunpack.c.h.b16 %v368
        %v607 = vunpack.c.l.b16 %v369
        %v608 = vunpack.c.h.b16 %v369
        %v609 = vunpack.c.l.b16 %v370
        %v610 = vunpack.c.h.b16 %v370
        %v611 = vunpack.c.l.b16 %v371
        %v612 = vunpack.c.h.b16 %v371
        %v613 = vunpack.c.l.b16 %v372
        %v614 = vunpack.c.h.b16 %v372
        %v615 = vunpack.c.l.b16 %v373
        %v616 = vunpack.c.h.b16 %v373
        %v617 = vunpack.c.l.b16 %v374
        %v618 = vunpack.c.h.b16 %v374
        %v619 = vunpack.c.l.b16 %v375
        %v620 = vunpack.c.h.b16 %v375
        %v621 = vunpack.c.l.b16 %v376
        %v622 = vunpack.c.h.b16 %v376
        %v623 = vunpack.c.l.b16 %v377
        %v624 = vunpack.c.h.b16 %v377
        %v625 = vunpack.c.l.b16 %v378
        %v626 = vunpack.c.h.b16 %v378
        %v627 = vunpack.c.l.b16 %v379
        %v628 = vunpack.c.h.b16 %v379
        %v629 = vunpack.c.l.b16 %v380
        %v630 = vunpack.c.h.b16 %v380
        %v631 = vunpack.c.l.b16 %v381
        %v632 = vunpack.c.h.b16 %v381
        %v633 = vunpack.c.l.b16 %v382
        %v634 = vunpack.c.h.b16 %v382
        %v635 = vunpack.c.l.b16 %v383
        %v636 = vunpack.c.h.b16 %v383
        %v637 = vunpack.c.l.b16 %v384
        %v638 = vunpack.c.h.b16 %v384
        %v639 = vunpack.c.l.b16 %v385
        %v640 = vunpack.c.h.b16 %v385
        %v641 = vunpack.c.l.b16 %v386
        %v642 = vunpack.c.h.b16 %v386
        %v643 = vpack.c.b16 %v581, %v579
        %v644 = vpack.c.b16 %v582, %v580
        %v645 = vpack.c.b16 %v585, %v583
        %v646 = vpack.c.b16 %v586, %v584
        %v647 = vpack.c.b16 %v589, %v587
        %v648 = vpack.c.b16 %v590, %v588
        %v649 = vpack.c.b16 %v593, %v591
        %v650 = vpack.c.b16 %v594, %v592
        %v651 = vpack.c.b16 %v597, %v595
        %v652 = vpack.c.b16 %v598, %v596
        %v653 = vpack.c.b16 %v601, %v599
        %v654 = vpack.c.b16 %v602, %v600
        %v655 = vpack.c.b16 %v605, %v603
        %v656 = vpack.c.b16 %v606, %v604
        %v657 = vpack.c.b16 %v609, %v607
        %v658 = vpack.c.b16 %v610, %v608
        %v659 = vpack.c.b16 %v613, %v611
        %v660 = vpack.c.b16 %v614, %v612
        %v661 = vpack.c.b16 %v617, %v615
        %v662 = vpack.c.b16 %v618, %v616
        %v663 = vpack.c.b16 %v621, %v619
        %v664 = vpack.c.b16 %v622, %v620
        %v665 = vpack.c.b16 %v625, %v623
        %v666 = vpack.c.b16 %v626, %v624
        %v667 = vpack.c.b16 %v629, %v627
        %v668 = vpack.c.b16 %v630, %v628
        %v669 = vpack.c.b16 %v633, %v631
        %v670 = vpack.c.b16 %v634, %v632
        %v671 = vpack.c.b16 %v637, %v635
        %v672 = vpack.c.b16 %v638, %v636
        %v673 = vpack.c.b16 %v641, %v639
        %v674 = vpack.c.b16 %v642, %v640
        %707 = vmatprep.subr.bf16.mxu0 %v658
        %708 = vmatpush1.bf16.xpose.msra.mxu0 %v657
        %709 = vmatprep.subr.bf16.mxu0 %v656
        %710 = vmatpush1.bf16.xpose.msra.mxu0 %v655
        %711 = vmatprep.subr.bf16.mxu0 %v654
        %712 = vmatpush1.bf16.xpose.msra.mxu0 %v653
        %713 = vmatprep.subr.bf16.mxu0 %v652
        %714 = vmatpush1.bf16.xpose.msra.mxu0 %v651
        %715 = vmatprep.subr.bf16.mxu0 %v650
        %716 = vmatpush1.bf16.xpose.msra.mxu0 %v649
        %717 = vmatprep.subr.bf16.mxu0 %v648
        %718 = vmatpush1.bf16.xpose.msra.mxu0 %v647
        %719 = vmatprep.subr.bf16.mxu0 %v646
        %720 = vmatpush1.bf16.xpose.msra.mxu0 %v645
        %721 = vmatprep.subr.bf16.mxu0 %v644
        %722 = vmatpush1.bf16.xpose.msra.mxu0 %v643
        %723 = vmatprep.subr.bf16.mxu0 %v674
        %724 = vmatpush2.bf16.xpose.msra.mxu0 %v673
        %725 = vmatprep.subr.bf16.mxu0 %v672
        %726 = vmatpush2.bf16.xpose.msra.mxu0 %v671
        %727 = vmatprep.subr.bf16.mxu0 %v670
        %728 = vmatpush2.bf16.xpose.msra.mxu0 %v669
        %729 = vmatprep.subr.bf16.mxu0 %v668
        %730 = vmatpush2.bf16.xpose.msra.mxu0 %v667
        %731 = vmatprep.subr.bf16.mxu0 %v666
        %732 = vmatpush2.bf16.xpose.msra.mxu0 %v665
        %733 = vmatprep.subr.bf16.mxu0 %v664
        %734 = vmatpush2.bf16.xpose.msra.mxu0 %v663
        %735 = vmatprep.subr.bf16.mxu0 %v662
        %736 = vmatpush2.bf16.xpose.msra.mxu0 %v661
        %737 = vmatprep.subr.bf16.mxu0 %v660
        %738 = vmatpush2.bf16.xpose.msra.mxu0 %v659
        %739 = vmatprep.mubr.bf16.mxu0 %v484
        %740 = vmatmul.mubr.bf16.gmra.mxu0 %v483
        %v741 = vpop.f32.mrf.mxu0
        %v742 = vadd.f32 0.0, %v741
        %v743 = vpop.f32.mrf.mxu0
        %v744 = vadd.f32 0.0, %v743
        %v745 = vpop.f32.mrf.mxu0
        %v746 = vadd.f32 0.0, %v745
        %v747 = vpop.f32.mrf.mxu0
        %v748 = vadd.f32 0.0, %v747
        %749 = vmatprep.mubr.bf16.mxu0 %v486
        %750 = vmatmul.mubr.bf16.gmra.mxu0 %v485
        %v751 = vpop.f32.mrf.mxu0
        %v752 = vadd.f32 0.0, %v751
        %v753 = vpop.f32.mrf.mxu0
        %v754 = vadd.f32 0.0, %v753
        %v755 = vpop.f32.mrf.mxu0
        %v756 = vadd.f32 0.0, %v755
        %v757 = vpop.f32.mrf.mxu0
        %v758 = vadd.f32 0.0, %v757
        %759 = vmatprep.mubr.bf16.mxu0 %v488
        %760 = vmatmul.mubr.bf16.gmra.mxu0 %v487
        %v761 = vpop.f32.mrf.mxu0
        %v762 = vadd.f32 0.0, %v761
        %v763 = vpop.f32.mrf.mxu0
        %v764 = vadd.f32 0.0, %v763
        %v765 = vpop.f32.mrf.mxu0
        %v766 = vadd.f32 0.0, %v765
        %v767 = vpop.f32.mrf.mxu0
        %v768 = vadd.f32 0.0, %v767
        %769 = vmatprep.mubr.bf16.mxu0 %v490
        %770 = vmatmul.mubr.bf16.gmra.mxu0 %v489
        %v771 = vpop.f32.mrf.mxu0
        %v772 = vadd.f32 0.0, %v771
        %v773 = vpop.f32.mrf.mxu0
        %v774 = vadd.f32 0.0, %v773
        %v775 = vpop.f32.mrf.mxu0
        %v776 = vadd.f32 0.0, %v775
        %v777 = vpop.f32.mrf.mxu0
        %v778 = vadd.f32 0.0, %v777
        %779 = vmatprep.mubr.bf16.mxu0 %v492
        %780 = vmatmul.mubr.bf16.gmra.mxu0 %v491
        %v781 = vpop.f32.mrf.mxu0
        %v782 = vadd.f32 0.0, %v781
        %v783 = vpop.f32.mrf.mxu0
        %v784 = vadd.f32 0.0, %v783
        %v785 = vpop.f32.mrf.mxu0
        %v786 = vadd.f32 0.0, %v785
        %v787 = vpop.f32.mrf.mxu0
        %v788 = vadd.f32 0.0, %v787
        %789 = vmatprep.mubr.bf16.mxu0 %v494
        %790 = vmatmul.mubr.bf16.gmra.mxu0 %v493
        %v791 = vpop.f32.mrf.mxu0
        %v792 = vadd.f32 0.0, %v791
        %v793 = vpop.f32.mrf.mxu0
        %v794 = vadd.f32 0.0, %v793
        %v795 = vpop.f32.mrf.mxu0
        %v796 = vadd.f32 0.0, %v795
        %v797 = vpop.f32.mrf.mxu0
        %v798 = vadd.f32 0.0, %v797
        %799 = vmatprep.mubr.bf16.mxu0 %v496
        %800 = vmatmul.mubr.bf16.gmra.mxu0 %v495
        %v801 = vpop.f32.mrf.mxu0
        %v802 = vadd.f32 0.0, %v801
        %v803 = vpop.f32.mrf.mxu0
        %v804 = vadd.f32 0.0, %v803
        %v805 = vpop.f32.mrf.mxu0
        %v806 = vadd.f32 0.0, %v805
        %v807 = vpop.f32.mrf.mxu0
        %v808 = vadd.f32 0.0, %v807
        %809 = vmatprep.mubr.bf16.mxu0 %v498
        %810 = vmatmul.mubr.bf16.gmra.mxu0 %v497
        %v811 = vpop.f32.mrf.mxu0
        %v812 = vadd.f32 0.0, %v811
        %v813 = vpop.f32.mrf.mxu0
        %v814 = vadd.f32 0.0, %v813
        %v815 = vpop.f32.mrf.mxu0
        %v816 = vadd.f32 0.0, %v815
        %v817 = vpop.f32.mrf.mxu0
        %v818 = vadd.f32 0.0, %v817
        %819 = vmatprep.mubr.bf16.mxu0 %v500
        %820 = vmatmul.mubr.bf16.gmra.mxu0 %v499
        %v821 = vpop.f32.mrf.mxu0
        %v822 = vadd.f32 0.0, %v821
        %v823 = vpop.f32.mrf.mxu0
        %v824 = vadd.f32 0.0, %v823
        %v825 = vpop.f32.mrf.mxu0
        %v826 = vadd.f32 0.0, %v825
        %v827 = vpop.f32.mrf.mxu0
        %v828 = vadd.f32 0.0, %v827
        %829 = vmatprep.mubr.bf16.mxu0 %v502
        %830 = vmatmul.mubr.bf16.gmra.mxu0 %v501
        %v831 = vpop.f32.mrf.mxu0
        %v832 = vadd.f32 0.0, %v831
        %v833 = vpop.f32.mrf.mxu0
        %v834 = vadd.f32 0.0, %v833
        %v835 = vpop.f32.mrf.mxu0
        %v836 = vadd.f32 0.0, %v835
        %v837 = vpop.f32.mrf.mxu0
        %v838 = vadd.f32 0.0, %v837
        %839 = vmatprep.mubr.bf16.mxu0 %v504
        %840 = vmatmul.mubr.bf16.gmra.mxu0 %v503
        %v841 = vpop.f32.mrf.mxu0
        %v842 = vadd.f32 0.0, %v841
        %v843 = vpop.f32.mrf.mxu0
        %v844 = vadd.f32 0.0, %v843
        %v845 = vpop.f32.mrf.mxu0
        %v846 = vadd.f32 0.0, %v845
        %v847 = vpop.f32.mrf.mxu0
        %v848 = vadd.f32 0.0, %v847
        %849 = vmatprep.mubr.bf16.mxu0 %v506
        %850 = vmatmul.mubr.bf16.gmra.mxu0 %v505
        %v851 = vpop.f32.mrf.mxu0
        %v852 = vadd.f32 0.0, %v851
        %v853 = vpop.f32.mrf.mxu0
        %v854 = vadd.f32 0.0, %v853
        %v855 = vpop.f32.mrf.mxu0
        %v856 = vadd.f32 0.0, %v855
        %v857 = vpop.f32.mrf.mxu0
        %v858 = vadd.f32 0.0, %v857
        %859 = vmatprep.mubr.bf16.mxu0 %v508
        %860 = vmatmul.mubr.bf16.gmra.mxu0 %v507
        %v861 = vpop.f32.mrf.mxu0
        %v862 = vadd.f32 0.0, %v861
        %v863 = vpop.f32.mrf.mxu0
        %v864 = vadd.f32 0.0, %v863
        %v865 = vpop.f32.mrf.mxu0
        %v866 = vadd.f32 0.0, %v865
        %v867 = vpop.f32.mrf.mxu0
        %v868 = vadd.f32 0.0, %v867
        %869 = vmatprep.mubr.bf16.mxu0 %v510
        %870 = vmatmul.mubr.bf16.gmra.mxu0 %v509
        %v871 = vpop.f32.mrf.mxu0
        %v872 = vadd.f32 0.0, %v871
        %v873 = vpop.f32.mrf.mxu0
        %v874 = vadd.f32 0.0, %v873
        %v875 = vpop.f32.mrf.mxu0
        %v876 = vadd.f32 0.0, %v875
        %v877 = vpop.f32.mrf.mxu0
        %v878 = vadd.f32 0.0, %v877
        %879 = vmatprep.mubr.bf16.mxu0 %v512
        %880 = vmatmul.mubr.bf16.gmra.mxu0 %v511
        %v881 = vpop.f32.mrf.mxu0
        %v882 = vadd.f32 0.0, %v881
        %v883 = vpop.f32.mrf.mxu0
        %v884 = vadd.f32 0.0, %v883
        %v885 = vpop.f32.mrf.mxu0
        %v886 = vadd.f32 0.0, %v885
        %v887 = vpop.f32.mrf.mxu0
        %v888 = vadd.f32 0.0, %v887
        %889 = vmatprep.mubr.bf16.mxu0 %v514
        %890 = vmatmul.mubr.bf16.gmra.mxu0 %v513
        %v891 = vpop.f32.mrf.mxu0
        %v892 = vadd.f32 0.0, %v891
        %v893 = vpop.f32.mrf.mxu0
        %v894 = vadd.f32 0.0, %v893
        %v895 = vpop.f32.mrf.mxu0
        %v896 = vadd.f32 0.0, %v895
        %v897 = vpop.f32.mrf.mxu0
        %v898 = vadd.f32 0.0, %v897
        %899 = vdwg.mxu0
        %s900 = smul.u32 %s321, 256
        %v901 = vlaneseq
        %v902 = vshrl.u32 %v901, 7
        %v903 = vadd.s32 %v902, 8
        %v904 = vadd.s32 %v902, 16
        %v905 = vadd.s32 %v902, 24
        %v906 = vadd.s32 %v902, 32
        %v907 = vadd.s32 %v902, 40
        %v908 = vadd.s32 %v902, 48
        %v909 = vadd.s32 %v902, 56
        %v910 = vadd.s32 %v902, 64
        %v911 = vadd.s32 %v902, 72
        %v912 = vadd.s32 %v902, 80
        %v913 = vadd.s32 %v902, 88
        %v914 = vadd.s32 %v902, 96
        %v915 = vadd.s32 %v902, 104
        %v916 = vadd.s32 %v902, 112
        %v917 = vadd.s32 %v902, 120
        %v918 = vadd.s32 %v902, 128
        %v919 = vadd.s32 %v902, 136
        %v920 = vadd.s32 %v902, 144
        %v921 = vadd.s32 %v902, 152
        %v922 = vadd.s32 %v902, 160
        %v923 = vadd.s32 %v902, 168
        %v924 = vadd.s32 %v902, 176
        %v925 = vadd.s32 %v902, 184
        %v926 = vadd.s32 %v902, 192
        %v927 = vadd.s32 %v902, 200
        %v928 = vadd.s32 %v902, 208
        %v929 = vadd.s32 %v902, 216
        %v930 = vadd.s32 %v902, 224
        %v931 = vadd.s32 %v902, 232
        %v932 = vadd.s32 %v902, 240
        %v933 = vadd.s32 %v902, 248
        %v934 = vstv %s900
        %v935 = vadd.s32 %v934, %v902
        %v936 = vadd.s32 %v934, %v903
        %v937 = vadd.s32 %v934, %v904
        %v938 = vadd.s32 %v934, %v905
        %v939 = vadd.s32 %v934, %v906
        %v940 = vadd.s32 %v934, %v907
        %v941 = vadd.s32 %v934, %v908
        %v942 = vadd.s32 %v934, %v909
        %v943 = vadd.s32 %v934, %v910
        %v944 = vadd.s32 %v934, %v911
        %v945 = vadd.s32 %v934, %v912
        %v946 = vadd.s32 %v934, %v913
        %v947 = vadd.s32 %v934, %v914
        %v948 = vadd.s32 %v934, %v915
        %v949 = vadd.s32 %v934, %v916
        %v950 = vadd.s32 %v934, %v917
        %v951 = vadd.s32 %v934, %v918
        %v952 = vadd.s32 %v934, %v919
        %v953 = vadd.s32 %v934, %v920
        %v954 = vadd.s32 %v934, %v921
        %v955 = vadd.s32 %v934, %v922
        %v956 = vadd.s32 %v934, %v923
        %v957 = vadd.s32 %v934, %v924
        %v958 = vadd.s32 %v934, %v925
        %v959 = vadd.s32 %v934, %v926
        %v960 = vadd.s32 %v934, %v927
        %v961 = vadd.s32 %v934, %v928
        %v962 = vadd.s32 %v934, %v929
        %v963 = vadd.s32 %v934, %v930
        %v964 = vadd.s32 %v934, %v931
        %v965 = vadd.s32 %v934, %v932
        %v966 = vadd.s32 %v934, %v933
        %s967 = smul.u32 %s322, 256
        %v968 = vlaneseq
        %v969 = vand.u32 %v968, 127
        %v970 = vadd.s32 %v969, 128
        %v971 = vstv %s967
        %v972 = vadd.s32 %v971, %v969
        %v973 = vadd.s32 %v971, %v970
        %vm974 = vcmp.gt.s32.totalorder %v972, %v935
        %vm975 = vcmp.gt.s32.totalorder %v973, %v935
        %vm976 = vcmp.gt.s32.totalorder %v972, %v936
        %vm977 = vcmp.gt.s32.totalorder %v973, %v936
        %vm978 = vcmp.gt.s32.totalorder %v972, %v937
        %vm979 = vcmp.gt.s32.totalorder %v973, %v937
        %vm980 = vcmp.gt.s32.totalorder %v972, %v938
        %vm981 = vcmp.gt.s32.totalorder %v973, %v938
        %vm982 = vcmp.gt.s32.totalorder %v972, %v939
        %vm983 = vcmp.gt.s32.totalorder %v973, %v939
        %vm984 = vcmp.gt.s32.totalorder %v972, %v940
        %vm985 = vcmp.gt.s32.totalorder %v973, %v940
        %vm986 = vcmp.gt.s32.totalorder %v972, %v941
        %vm987 = vcmp.gt.s32.totalorder %v973, %v941
        %vm988 = vcmp.gt.s32.totalorder %v972, %v942
        %vm989 = vcmp.gt.s32.totalorder %v973, %v942
        %vm990 = vcmp.gt.s32.totalorder %v972, %v943
        %vm991 = vcmp.gt.s32.totalorder %v973, %v943
        %vm992 = vcmp.gt.s32.totalorder %v972, %v944
        %vm993 = vcmp.gt.s32.totalorder %v973, %v944
        %vm994 = vcmp.gt.s32.totalorder %v972, %v945
        %vm995 = vcmp.gt.s32.totalorder %v973, %v945
        %vm996 = vcmp.gt.s32.totalorder %v972, %v946
        %vm997 = vcmp.gt.s32.totalorder %v973, %v946
        %vm998 = vcmp.gt.s32.totalorder %v972, %v947
        %vm999 = vcmp.gt.s32.totalorder %v973, %v947
        %vm1000 = vcmp.gt.s32.totalorder %v972, %v948
        %vm1001 = vcmp.gt.s32.totalorder %v973, %v948
        %vm1002 = vcmp.gt.s32.totalorder %v972, %v949
        %vm1003 = vcmp.gt.s32.totalorder %v973, %v949
        %vm1004 = vcmp.gt.s32.totalorder %v972, %v950
        %vm1005 = vcmp.gt.s32.totalorder %v973, %v950
        %vm1006 = vcmp.gt.s32.totalorder %v972, %v951
        %vm1007 = vcmp.gt.s32.totalorder %v973, %v951
        %vm1008 = vcmp.gt.s32.totalorder %v972, %v952
        %vm1009 = vcmp.gt.s32.totalorder %v973, %v952
        %vm1010 = vcmp.gt.s32.totalorder %v972, %v953
        %vm1011 = vcmp.gt.s32.totalorder %v973, %v953
        %vm1012 = vcmp.gt.s32.totalorder %v972, %v954
        %vm1013 = vcmp.gt.s32.totalorder %v973, %v954
        %vm1014 = vcmp.gt.s32.totalorder %v972, %v955
        %vm1015 = vcmp.gt.s32.totalorder %v973, %v955
        %vm1016 = vcmp.gt.s32.totalorder %v972, %v956
        %vm1017 = vcmp.gt.s32.totalorder %v973, %v956
        %vm1018 = vcmp.gt.s32.totalorder %v972, %v957
        %vm1019 = vcmp.gt.s32.totalorder %v973, %v957
        %vm1020 = vcmp.gt.s32.totalorder %v972, %v958
        %vm1021 = vcmp.gt.s32.totalorder %v973, %v958
        %vm1022 = vcmp.gt.s32.totalorder %v972, %v959
        %vm1023 = vcmp.gt.s32.totalorder %v973, %v959
        %vm1024 = vcmp.gt.s32.totalorder %v972, %v960
        %vm1025 = vcmp.gt.s32.totalorder %v973, %v960
        %vm1026 = vcmp.gt.s32.totalorder %v972, %v961
        %vm1027 = vcmp.gt.s32.totalorder %v973, %v961
        %vm1028 = vcmp.gt.s32.totalorder %v972, %v962
        %vm1029 = vcmp.gt.s32.totalorder %v973, %v962
        %vm1030 = vcmp.gt.s32.totalorder %v972, %v963
        %vm1031 = vcmp.gt.s32.totalorder %v973, %v963
        %vm1032 = vcmp.gt.s32.totalorder %v972, %v964
        %vm1033 = vcmp.gt.s32.totalorder %v973, %v964
        %vm1034 = vcmp.gt.s32.totalorder %v972, %v965
        %vm1035 = vcmp.gt.s32.totalorder %v973, %v965
        %vm1036 = vcmp.gt.s32.totalorder %v972, %v966
        %vm1037 = vcmp.gt.s32.totalorder %v973, %v966
        %vm1038 = vcmp.lt.s32.totalorder %v972, 500
        %vm1039 = vcmp.lt.s32.totalorder %v973, 500
        %v1040 = vsel %vm1038, 1, 0
        %v1041 = vsel %vm1039, 1, 0
        %vm1042 = vcmp.eq.s32.totalorder %v1040, 1
        %vm1043 = vcmp.eq.s32.totalorder %v1041, 1
        %vm1044 = vmand %vm974, %vm1042
        %vm1045 = vmand %vm975, %vm1043
        %vm1046 = vmand %vm976, %vm1042
        %vm1047 = vmand %vm977, %vm1043
        %vm1048 = vmand %vm978, %vm1042
        %vm1049 = vmand %vm979, %vm1043
        %vm1050 = vmand %vm980, %vm1042
        %vm1051 = vmand %vm981, %vm1043
        %vm1052 = vmand %vm982, %vm1042
        %vm1053 = vmand %vm983, %vm1043
        %vm1054 = vmand %vm984, %vm1042
        %vm1055 = vmand %vm985, %vm1043
        %vm1056 = vmand %vm986, %vm1042
        %vm1057 = vmand %vm987, %vm1043
        %vm1058 = vmand %vm988, %vm1042
        %vm1059 = vmand %vm989, %vm1043
        %vm1060 = vmand %vm990, %vm1042
        %vm1061 = vmand %vm991, %vm1043
        %vm1062 = vmand %vm992, %vm1042
        %vm1063 = vmand %vm993, %vm1043
        %vm1064 = vmand %vm994, %vm1042
        %vm1065 = vmand %vm995, %vm1043
        %vm1066 = vmand %vm996, %vm1042
        %vm1067 = vmand %vm997, %vm1043
        %vm1068 = vmand %vm998, %vm1042
        %vm1069 = vmand %vm999, %vm1043
        %vm1070 = vmand %vm1000, %vm1042
        %vm1071 = vmand %vm1001, %vm1043
        %vm1072 = vmand %vm1002, %vm1042
        %vm1073 = vmand %vm1003, %vm1043
        %vm1074 = vmand %vm1004, %vm1042
        %vm1075 = vmand %vm1005, %vm1043
        %vm1076 = vmand %vm1006, %vm1042
        %vm1077 = vmand %vm1007, %vm1043
        %vm1078 = vmand %vm1008, %vm1042
        %vm1079 = vmand %vm1009, %vm1043
        %vm1080 = vmand %vm1010, %vm1042
        %vm1081 = vmand %vm1011, %vm1043
        %vm1082 = vmand %vm1012, %vm1042
        %vm1083 = vmand %vm1013, %vm1043
        %vm1084 = vmand %vm1014, %vm1042
        %vm1085 = vmand %vm1015, %vm1043
        %vm1086 = vmand %vm1016, %vm1042
        %vm1087 = vmand %vm1017, %vm1043
        %vm1088 = vmand %vm1018, %vm1042
        %vm1089 = vmand %vm1019, %vm1043
        %vm1090 = vmand %vm1020, %vm1042
        %vm1091 = vmand %vm1021, %vm1043
        %vm1092 = vmand %vm1022, %vm1042
        %vm1093 = vmand %vm1023, %vm1043
        %vm1094 = vmand %vm1024, %vm1042
        %vm1095 = vmand %vm1025, %vm1043
        %vm1096 = vmand %vm1026, %vm1042
        %vm1097 = vmand %vm1027, %vm1043
        %vm1098 = vmand %vm1028, %vm1042
        %vm1099 = vmand %vm1029, %vm1043
        %vm1100 = vmand %vm1030, %vm1042
        %vm1101 = vmand %vm1031, %vm1043
        %vm1102 = vmand %vm1032, %vm1042
        %vm1103 = vmand %vm1033, %vm1043
        %vm1104 = vmand %vm1034, %vm1042
        %vm1105 = vmand %vm1035, %vm1043
        %vm1106 = vmand %vm1036, %vm1042
        %vm1107 = vmand %vm1037, %vm1043
        %v1108 = vld [vmem:[%s311] sm:$0xff]
        %v1109 = vld [vmem:[%s311 + $0x8] sm:$0xff]
        %v1110 = vld [vmem:[%s311 + $0x10] sm:$0xff]
        %v1111 = vld [vmem:[%s311 + $0x18] sm:$0xff]
        %v1112 = vld [vmem:[%s311 + $0x20] sm:$0xff]
        %v1113 = vld [vmem:[%s311 + $0x28] sm:$0xff]
        %v1114 = vld [vmem:[%s311 + $0x30] sm:$0xff]
        %v1115 = vld [vmem:[%s311 + $0x38] sm:$0xff]
        %v1116 = vld [vmem:[%s311 + $0x40] sm:$0xff]
        %v1117 = vld [vmem:[%s311 + $0x48] sm:$0xff]
        %v1118 = vld [vmem:[%s311 + $0x50] sm:$0xff]
        %v1119 = vld [vmem:[%s311 + $0x58] sm:$0xff]
        %v1120 = vld [vmem:[%s311 + $0x60] sm:$0xff]
        %v1121 = vld [vmem:[%s311 + $0x68] sm:$0xff]
        %v1122 = vld [vmem:[%s311 + $0x70] sm:$0xff]
        %v1123 = vld [vmem:[%s311 + $0x78] sm:$0xff]
        %v1124 = vld [vmem:[%s311 + $0x80] sm:$0xff]
        %v1125 = vld [vmem:[%s311 + $0x88] sm:$0xff]
        %v1126 = vld [vmem:[%s311 + $0x90] sm:$0xff]
        %v1127 = vld [vmem:[%s311 + $0x98] sm:$0xff]
        %v1128 = vld [vmem:[%s311 + $0xa0] sm:$0xff]
        %v1129 = vld [vmem:[%s311 + $0xa8] sm:$0xff]
        %v1130 = vld [vmem:[%s311 + $0xb0] sm:$0xff]
        %v1131 = vld [vmem:[%s311 + $0xb8] sm:$0xff]
        %v1132 = vld [vmem:[%s311 + $0xc0] sm:$0xff]
        %v1133 = vld [vmem:[%s311 + $0xc8] sm:$0xff]
        %v1134 = vld [vmem:[%s311 + $0xd0] sm:$0xff]
        %v1135 = vld [vmem:[%s311 + $0xd8] sm:$0xff]
        %v1136 = vld [vmem:[%s311 + $0xe0] sm:$0xff]
        %v1137 = vld [vmem:[%s311 + $0xe8] sm:$0xff]
        %v1138 = vld [vmem:[%s311 + $0xf0] sm:$0xff]
        %v1139 = vld [vmem:[%s311 + $0xf8] sm:$0xff]
        %v1140 = vld [vmem:[%s318] sm:$0x3]
        %1141 = vset.pattern.permute.xlu0 0
        %1142 = vperm.xlu0 %1141, %v1108
        %v1143 = vpop.permute.xlu0 %1142
        %1144 = vset.pattern.permute.xlu0 0
        %1145 = vperm.xlu0 %1144, %v1109
        %v1146 = vpop.permute.xlu0 %1145
        %1147 = vset.pattern.permute.xlu0 0
        %1148 = vperm.xlu0 %1147, %v1110
        %v1149 = vpop.permute.xlu0 %1148
        %1150 = vset.pattern.permute.xlu0 0
        %1151 = vperm.xlu0 %1150, %v1111
        %v1152 = vpop.permute.xlu0 %1151
        %1153 = vset.pattern.permute.xlu0 0
        %1154 = vperm.xlu0 %1153, %v1112
        %v1155 = vpop.permute.xlu0 %1154
        %1156 = vset.pattern.permute.xlu0 0
        %1157 = vperm.xlu0 %1156, %v1113
        %v1158 = vpop.permute.xlu0 %1157
        %1159 = vset.pattern.permute.xlu0 0
        %1160 = vperm.xlu0 %1159, %v1114
        %v1161 = vpop.permute.xlu0 %1160
        %1162 = vset.pattern.permute.xlu0 0
        %1163 = vperm.xlu0 %1162, %v1115
        %v1164 = vpop.permute.xlu0 %1163
        %1165 = vset.pattern.permute.xlu0 0
        %1166 = vperm.xlu0 %1165, %v1116
        %v1167 = vpop.permute.xlu0 %1166
        %1168 = vset.pattern.permute.xlu0 0
        %1169 = vperm.xlu0 %1168, %v1117
        %v1170 = vpop.permute.xlu0 %1169
        %1171 = vset.pattern.permute.xlu0 0
        %1172 = vperm.xlu0 %1171, %v1118
        %v1173 = vpop.permute.xlu0 %1172
        %1174 = vset.pattern.permute.xlu0 0
        %1175 = vperm.xlu0 %1174, %v1119
        %v1176 = vpop.permute.xlu0 %1175
        %1177 = vset.pattern.permute.xlu0 0
        %1178 = vperm.xlu0 %1177, %v1120
        %v1179 = vpop.permute.xlu0 %1178
        %1180 = vset.pattern.permute.xlu0 0
        %1181 = vperm.xlu0 %1180, %v1121
        %v1182 = vpop.permute.xlu0 %1181
        %1183 = vset.pattern.permute.xlu0 0
        %1184 = vperm.xlu0 %1183, %v1122
        %v1185 = vpop.permute.xlu0 %1184
        %1186 = vset.pattern.permute.xlu0 0
        %1187 = vperm.xlu0 %1186, %v1123
        %v1188 = vpop.permute.xlu0 %1187
        %1189 = vset.pattern.permute.xlu0 0
        %1190 = vperm.xlu0 %1189, %v1124
        %v1191 = vpop.permute.xlu0 %1190
        %1192 = vset.pattern.permute.xlu0 0
        %1193 = vperm.xlu0 %1192, %v1125
        %v1194 = vpop.permute.xlu0 %1193
        %1195 = vset.pattern.permute.xlu0 0
        %1196 = vperm.xlu0 %1195, %v1126
        %v1197 = vpop.permute.xlu0 %1196
        %1198 = vset.pattern.permute.xlu0 0
        %1199 = vperm.xlu0 %1198, %v1127
        %v1200 = vpop.permute.xlu0 %1199
        %1201 = vset.pattern.permute.xlu0 0
        %1202 = vperm.xlu0 %1201, %v1128
        %v1203 = vpop.permute.xlu0 %1202
        %1204 = vset.pattern.permute.xlu0 0
        %1205 = vperm.xlu0 %1204, %v1129
        %v1206 = vpop.permute.xlu0 %1205
        %1207 = vset.pattern.permute.xlu0 0
        %1208 = vperm.xlu0 %1207, %v1130
        %v1209 = vpop.permute.xlu0 %1208
        %1210 = vset.pattern.permute.xlu0 0
        %1211 = vperm.xlu0 %1210, %v1131
        %v1212 = vpop.permute.xlu0 %1211
        %1213 = vset.pattern.permute.xlu0 0
        %1214 = vperm.xlu0 %1213, %v1132
        %v1215 = vpop.permute.xlu0 %1214
        %1216 = vset.pattern.permute.xlu0 0
        %1217 = vperm.xlu0 %1216, %v1133
        %v1218 = vpop.permute.xlu0 %1217
        %1219 = vset.pattern.permute.xlu0 0
        %1220 = vperm.xlu0 %1219, %v1134
        %v1221 = vpop.permute.xlu0 %1220
        %1222 = vset.pattern.permute.xlu0 0
        %1223 = vperm.xlu0 %1222, %v1135
        %v1224 = vpop.permute.xlu0 %1223
        %1225 = vset.pattern.permute.xlu0 0
        %1226 = vperm.xlu0 %1225, %v1136
        %v1227 = vpop.permute.xlu0 %1226
        %1228 = vset.pattern.permute.xlu0 0
        %1229 = vperm.xlu0 %1228, %v1137
        %v1230 = vpop.permute.xlu0 %1229
        %1231 = vset.pattern.permute.xlu0 0
        %1232 = vperm.xlu0 %1231, %v1138
        %v1233 = vpop.permute.xlu0 %1232
        %1234 = vset.pattern.permute.xlu0 0
        %1235 = vperm.xlu0 %1234, %v1139
        %v1236 = vpop.permute.xlu0 %1235
        %v1237 = vlaneseq
        %v1238 = vshrl.u32 %v1237, 7
        %v1239 = vsub.s32 0, %v1238
        %v1240 = vrot.slane %v1140, %v1239
        %v1241 = vlaneseq
        %v1242 = vshrl.u32 %v1241, 7
        %v1243 = vsub.s32 1, %v1242
        %v1244 = vrot.slane %v1140, %v1243
        %vm1245 = vcmp.eq.s32.totalorder %v1143, %v1240
        %vm1246 = vcmp.eq.s32.totalorder %v1143, %v1244
        %vm1247 = vcmp.eq.s32.totalorder %v1146, %v1240
        %vm1248 = vcmp.eq.s32.totalorder %v1146, %v1244
        %vm1249 = vcmp.eq.s32.totalorder %v1149, %v1240
        %vm1250 = vcmp.eq.s32.totalorder %v1149, %v1244
        %vm1251 = vcmp.eq.s32.totalorder %v1152, %v1240
        %vm1252 = vcmp.eq.s32.totalorder %v1152, %v1244
        %vm1253 = vcmp.eq.s32.totalorder %v1155, %v1240
        %vm1254 = vcmp.eq.s32.totalorder %v1155, %v1244
        %vm1255 = vcmp.eq.s32.totalorder %v1158, %v1240
        %vm1256 = vcmp.eq.s32.totalorder %v1158, %v1244
        %vm1257 = vcmp.eq.s32.totalorder %v1161, %v1240
        %vm1258 = vcmp.eq.s32.totalorder %v1161, %v1244
        %vm1259 = vcmp.eq.s32.totalorder %v1164, %v1240
        %vm1260 = vcmp.eq.s32.totalorder %v1164, %v1244
        %vm1261 = vcmp.eq.s32.totalorder %v1167, %v1240
        %vm1262 = vcmp.eq.s32.totalorder %v1167, %v1244
        %vm1263 = vcmp.eq.s32.totalorder %v1170, %v1240
        %vm1264 = vcmp.eq.s32.totalorder %v1170, %v1244
        %vm1265 = vcmp.eq.s32.totalorder %v1173, %v1240
        %vm1266 = vcmp.eq.s32.totalorder %v1173, %v1244
        %vm1267 = vcmp.eq.s32.totalorder %v1176, %v1240
        %vm1268 = vcmp.eq.s32.totalorder %v1176, %v1244
        %vm1269 = vcmp.eq.s32.totalorder %v1179, %v1240
        %vm1270 = vcmp.eq.s32.totalorder %v1179, %v1244
        %vm1271 = vcmp.eq.s32.totalorder %v1182, %v1240
        %vm1272 = vcmp.eq.s32.totalorder %v1182, %v1244
        %vm1273 = vcmp.eq.s32.totalorder %v1185, %v1240
        %vm1274 = vcmp.eq.s32.totalorder %v1185, %v1244
        %vm1275 = vcmp.eq.s32.totalorder %v1188, %v1240
        %vm1276 = vcmp.eq.s32.totalorder %v1188, %v1244
        %vm1277 = vcmp.eq.s32.totalorder %v1191, %v1240
        %vm1278 = vcmp.eq.s32.totalorder %v1191, %v1244
        %vm1279 = vcmp.eq.s32.totalorder %v1194, %v1240
        %vm1280 = vcmp.eq.s32.totalorder %v1194, %v1244
        %vm1281 = vcmp.eq.s32.totalorder %v1197, %v1240
        %vm1282 = vcmp.eq.s32.totalorder %v1197, %v1244
        %vm1283 = vcmp.eq.s32.totalorder %v1200, %v1240
        %vm1284 = vcmp.eq.s32.totalorder %v1200, %v1244
        %vm1285 = vcmp.eq.s32.totalorder %v1203, %v1240
        %vm1286 = vcmp.eq.s32.totalorder %v1203, %v1244
        %vm1287 = vcmp.eq.s32.totalorder %v1206, %v1240
        %vm1288 = vcmp.eq.s32.totalorder %v1206, %v1244
        %vm1289 = vcmp.eq.s32.totalorder %v1209, %v1240
        %vm1290 = vcmp.eq.s32.totalorder %v1209, %v1244
        %vm1291 = vcmp.eq.s32.totalorder %v1212, %v1240
        %vm1292 = vcmp.eq.s32.totalorder %v1212, %v1244
        %vm1293 = vcmp.eq.s32.totalorder %v1215, %v1240
        %vm1294 = vcmp.eq.s32.totalorder %v1215, %v1244
        %vm1295 = vcmp.eq.s32.totalorder %v1218, %v1240
        %vm1296 = vcmp.eq.s32.totalorder %v1218, %v1244
        %vm1297 = vcmp.eq.s32.totalorder %v1221, %v1240
        %vm1298 = vcmp.eq.s32.totalorder %v1221, %v1244
        %vm1299 = vcmp.eq.s32.totalorder %v1224, %v1240
        %vm1300 = vcmp.eq.s32.totalorder %v1224, %v1244
        %vm1301 = vcmp.eq.s32.totalorder %v1227, %v1240
        %vm1302 = vcmp.eq.s32.totalorder %v1227, %v1244
        %vm1303 = vcmp.eq.s32.totalorder %v1230, %v1240
        %vm1304 = vcmp.eq.s32.totalorder %v1230, %v1244
        %vm1305 = vcmp.eq.s32.totalorder %v1233, %v1240
        %vm1306 = vcmp.eq.s32.totalorder %v1233, %v1244
        %vm1307 = vcmp.eq.s32.totalorder %v1236, %v1240
        %vm1308 = vcmp.eq.s32.totalorder %v1236, %v1244
        %vm1309 = vmand %vm1245, %vm1044
        %vm1310 = vmand %vm1246, %vm1045
        %vm1311 = vmand %vm1247, %vm1046
        %vm1312 = vmand %vm1248, %vm1047
        %vm1313 = vmand %vm1249, %vm1048
        %vm1314 = vmand %vm1250, %vm1049
        %vm1315 = vmand %vm1251, %vm1050
        %vm1316 = vmand %vm1252, %vm1051
        %vm1317 = vmand %vm1253, %vm1052
        %vm1318 = vmand %vm1254, %vm1053
        %vm1319 = vmand %vm1255, %vm1054
        %vm1320 = vmand %vm1256, %vm1055
        %vm1321 = vmand %vm1257, %vm1056
        %vm1322 = vmand %vm1258, %vm1057
        %vm1323 = vmand %vm1259, %vm1058
        %vm1324 = vmand %vm1260, %vm1059
        %vm1325 = vmand %vm1261, %vm1060
        %vm1326 = vmand %vm1262, %vm1061
        %vm1327 = vmand %vm1263, %vm1062
        %vm1328 = vmand %vm1264, %vm1063
        %vm1329 = vmand %vm1265, %vm1064
        %vm1330 = vmand %vm1266, %vm1065
        %vm1331 = vmand %vm1267, %vm1066
        %vm1332 = vmand %vm1268, %vm1067
        %vm1333 = vmand %vm1269, %vm1068
        %vm1334 = vmand %vm1270, %vm1069
        %vm1335 = vmand %vm1271, %vm1070
        %vm1336 = vmand %vm1272, %vm1071
        %vm1337 = vmand %vm1273, %vm1072
        %vm1338 = vmand %vm1274, %vm1073
        %vm1339 = vmand %vm1275, %vm1074
        %vm1340 = vmand %vm1276, %vm1075
        %vm1341 = vmand %vm1277, %vm1076
        %vm1342 = vmand %vm1278, %vm1077
        %vm1343 = vmand %vm1279, %vm1078
        %vm1344 = vmand %vm1280, %vm1079
        %vm1345 = vmand %vm1281, %vm1080
        %vm1346 = vmand %vm1282, %vm1081
        %vm1347 = vmand %vm1283, %vm1082
        %vm1348 = vmand %vm1284, %vm1083
        %vm1349 = vmand %vm1285, %vm1084
        %vm1350 = vmand %vm1286, %vm1085
        %vm1351 = vmand %vm1287, %vm1086
        %vm1352 = vmand %vm1288, %vm1087
        %vm1353 = vmand %vm1289, %vm1088
        %vm1354 = vmand %vm1290, %vm1089
        %vm1355 = vmand %vm1291, %vm1090
        %vm1356 = vmand %vm1292, %vm1091
        %vm1357 = vmand %vm1293, %vm1092
        %vm1358 = vmand %vm1294, %vm1093
        %vm1359 = vmand %vm1295, %vm1094
        %vm1360 = vmand %vm1296, %vm1095
        %vm1361 = vmand %vm1297, %vm1096
        %vm1362 = vmand %vm1298, %vm1097
        %vm1363 = vmand %vm1299, %vm1098
        %vm1364 = vmand %vm1300, %vm1099
        %vm1365 = vmand %vm1301, %vm1100
        %vm1366 = vmand %vm1302, %vm1101
        %vm1367 = vmand %vm1303, %vm1102
        %vm1368 = vmand %vm1304, %vm1103
        %vm1369 = vmand %vm1305, %vm1104
        %vm1370 = vmand %vm1306, %vm1105
        %vm1371 = vmand %vm1307, %vm1106
        %vm1372 = vmand %vm1308, %vm1107
        %vm1373 = vmxor %vm1245, 1
        %vm1374 = vmxor %vm1246, 1
        %vm1375 = vmxor %vm1247, 1
        %vm1376 = vmxor %vm1248, 1
        %vm1377 = vmxor %vm1249, 1
        %vm1378 = vmxor %vm1250, 1
        %vm1379 = vmxor %vm1251, 1
        %vm1380 = vmxor %vm1252, 1
        %vm1381 = vmxor %vm1253, 1
        %vm1382 = vmxor %vm1254, 1
        %vm1383 = vmxor %vm1255, 1
        %vm1384 = vmxor %vm1256, 1
        %vm1385 = vmxor %vm1257, 1
        %vm1386 = vmxor %vm1258, 1
        %vm1387 = vmxor %vm1259, 1
        %vm1388 = vmxor %vm1260, 1
        %vm1389 = vmxor %vm1261, 1
        %vm1390 = vmxor %vm1262, 1
        %vm1391 = vmxor %vm1263, 1
        %vm1392 = vmxor %vm1264, 1
        %vm1393 = vmxor %vm1265, 1
        %vm1394 = vmxor %vm1266, 1
        %vm1395 = vmxor %vm1267, 1
        %vm1396 = vmxor %vm1268, 1
        %vm1397 = vmxor %vm1269, 1
        %vm1398 = vmxor %vm1270, 1
        %vm1399 = vmxor %vm1271, 1
        %vm1400 = vmxor %vm1272, 1
        %vm1401 = vmxor %vm1273, 1
        %vm1402 = vmxor %vm1274, 1
        %vm1403 = vmxor %vm1275, 1
        %vm1404 = vmxor %vm1276, 1
        %vm1405 = vmxor %vm1277, 1
        %vm1406 = vmxor %vm1278, 1
        %vm1407 = vmxor %vm1279, 1
        %vm1408 = vmxor %vm1280, 1
        %vm1409 = vmxor %vm1281, 1
        %vm1410 = vmxor %vm1282, 1
        %vm1411 = vmxor %vm1283, 1
        %vm1412 = vmxor %vm1284, 1
        %vm1413 = vmxor %vm1285, 1
        %vm1414 = vmxor %vm1286, 1
        %vm1415 = vmxor %vm1287, 1
        %vm1416 = vmxor %vm1288, 1
        %vm1417 = vmxor %vm1289, 1
        %vm1418 = vmxor %vm1290, 1
        %vm1419 = vmxor %vm1291, 1
        %vm1420 = vmxor %vm1292, 1
        %vm1421 = vmxor %vm1293, 1
        %vm1422 = vmxor %vm1294, 1
        %vm1423 = vmxor %vm1295, 1
        %vm1424 = vmxor %vm1296, 1
        %vm1425 = vmxor %vm1297, 1
        %vm1426 = vmxor %vm1298, 1
        %vm1427 = vmxor %vm1299, 1
        %vm1428 = vmxor %vm1300, 1
        %vm1429 = vmxor %vm1301, 1
        %vm1430 = vmxor %vm1302, 1
        %vm1431 = vmxor %vm1303, 1
        %vm1432 = vmxor %vm1304, 1
        %vm1433 = vmxor %vm1305, 1
        %vm1434 = vmxor %vm1306, 1
        %vm1435 = vmxor %vm1307, 1
        %vm1436 = vmxor %vm1308, 1
        %vm1437 = vmand %vm1373, %vm1044
        %vm1438 = vmand %vm1374, %vm1045
        %vm1439 = vmand %vm1375, %vm1046
        %vm1440 = vmand %vm1376, %vm1047
        %vm1441 = vmand %vm1377, %vm1048
        %vm1442 = vmand %vm1378, %vm1049
        %vm1443 = vmand %vm1379, %vm1050
        %vm1444 = vmand %vm1380, %vm1051
        %vm1445 = vmand %vm1381, %vm1052
        %vm1446 = vmand %vm1382, %vm1053
        %vm1447 = vmand %vm1383, %vm1054
        %vm1448 = vmand %vm1384, %vm1055
        %vm1449 = vmand %vm1385, %vm1056
        %vm1450 = vmand %vm1386, %vm1057
        %vm1451 = vmand %vm1387, %vm1058
        %vm1452 = vmand %vm1388, %vm1059
        %vm1453 = vmand %vm1389, %vm1060
        %vm1454 = vmand %vm1390, %vm1061
        %vm1455 = vmand %vm1391, %vm1062
        %vm1456 = vmand %vm1392, %vm1063
        %vm1457 = vmand %vm1393, %vm1064
        %vm1458 = vmand %vm1394, %vm1065
        %vm1459 = vmand %vm1395, %vm1066
        %vm1460 = vmand %vm1396, %vm1067
        %vm1461 = vmand %vm1397, %vm1068
        %vm1462 = vmand %vm1398, %vm1069
        %vm1463 = vmand %vm1399, %vm1070
        %vm1464 = vmand %vm1400, %vm1071
        %vm1465 = vmand %vm1401, %vm1072
        %vm1466 = vmand %vm1402, %vm1073
        %vm1467 = vmand %vm1403, %vm1074
        %vm1468 = vmand %vm1404, %vm1075
        %vm1469 = vmand %vm1405, %vm1076
        %vm1470 = vmand %vm1406, %vm1077
        %vm1471 = vmand %vm1407, %vm1078
        %vm1472 = vmand %vm1408, %vm1079
        %vm1473 = vmand %vm1409, %vm1080
        %vm1474 = vmand %vm1410, %vm1081
        %vm1475 = vmand %vm1411, %vm1082
        %vm1476 = vmand %vm1412, %vm1083
        %vm1477 = vmand %vm1413, %vm1084
        %vm1478 = vmand %vm1414, %vm1085
        %vm1479 = vmand %vm1415, %vm1086
        %vm1480 = vmand %vm1416, %vm1087
        %vm1481 = vmand %vm1417, %vm1088
        %vm1482 = vmand %vm1418, %vm1089
        %vm1483 = vmand %vm1419, %vm1090
        %vm1484 = vmand %vm1420, %vm1091
        %vm1485 = vmand %vm1421, %vm1092
        %vm1486 = vmand %vm1422, %vm1093
        %vm1487 = vmand %vm1423, %vm1094
        %vm1488 = vmand %vm1424, %vm1095
        %vm1489 = vmand %vm1425, %vm1096
        %vm1490 = vmand %vm1426, %vm1097
        %vm1491 = vmand %vm1427, %vm1098
        %vm1492 = vmand %vm1428, %vm1099
        %vm1493 = vmand %vm1429, %vm1100
        %vm1494 = vmand %vm1430, %vm1101
        %vm1495 = vmand %vm1431, %vm1102
        %vm1496 = vmand %vm1432, %vm1103
        %vm1497 = vmand %vm1433, %vm1104
        %vm1498 = vmand %vm1434, %vm1105
        %vm1499 = vmand %vm1435, %vm1106
        %vm1500 = vmand %vm1436, %vm1107
        %v1501 = vsub.f32 1.25, %v742
        %v1502 = vsub.f32 1.25, %v744
        %v1503 = vsub.f32 1.25, %v746
        %v1504 = vsub.f32 1.25, %v748
        %v1505 = vsub.f32 1.25, %v752
        %v1506 = vsub.f32 1.25, %v754
        %v1507 = vsub.f32 1.25, %v756
        %v1508 = vsub.f32 1.25, %v758
        %v1509 = vsub.f32 1.25, %v762
        %v1510 = vsub.f32 1.25, %v764
        %v1511 = vsub.f32 1.25, %v766
        %v1512 = vsub.f32 1.25, %v768
        %v1513 = vsub.f32 1.25, %v772
        %v1514 = vsub.f32 1.25, %v774
        %v1515 = vsub.f32 1.25, %v776
        %v1516 = vsub.f32 1.25, %v778
        %v1517 = vsub.f32 1.25, %v782
        %v1518 = vsub.f32 1.25, %v784
        %v1519 = vsub.f32 1.25, %v786
        %v1520 = vsub.f32 1.25, %v788
        %v1521 = vsub.f32 1.25, %v792
        %v1522 = vsub.f32 1.25, %v794
        %v1523 = vsub.f32 1.25, %v796
        %v1524 = vsub.f32 1.25, %v798
        %v1525 = vsub.f32 1.25, %v802
        %v1526 = vsub.f32 1.25, %v804
        %v1527 = vsub.f32 1.25, %v806
        %v1528 = vsub.f32 1.25, %v808
        %v1529 = vsub.f32 1.25, %v812
        %v1530 = vsub.f32 1.25, %v814
        %v1531 = vsub.f32 1.25, %v816
        %v1532 = vsub.f32 1.25, %v818
        %v1533 = vsub.f32 1.25, %v822
        %v1534 = vsub.f32 1.25, %v824
        %v1535 = vsub.f32 1.25, %v826
        %v1536 = vsub.f32 1.25, %v828
        %v1537 = vsub.f32 1.25, %v832
        %v1538 = vsub.f32 1.25, %v834
        %v1539 = vsub.f32 1.25, %v836
        %v1540 = vsub.f32 1.25, %v838
        %v1541 = vsub.f32 1.25, %v842
        %v1542 = vsub.f32 1.25, %v844
        %v1543 = vsub.f32 1.25, %v846
        %v1544 = vsub.f32 1.25, %v848
        %v1545 = vsub.f32 1.25, %v852
        %v1546 = vsub.f32 1.25, %v854
        %v1547 = vsub.f32 1.25, %v856
        %v1548 = vsub.f32 1.25, %v858
        %v1549 = vsub.f32 1.25, %v862
        %v1550 = vsub.f32 1.25, %v864
        %v1551 = vsub.f32 1.25, %v866
        %v1552 = vsub.f32 1.25, %v868
        %v1553 = vsub.f32 1.25, %v872
        %v1554 = vsub.f32 1.25, %v874
        %v1555 = vsub.f32 1.25, %v876
        %v1556 = vsub.f32 1.25, %v878
        %v1557 = vsub.f32 1.25, %v882
        %v1558 = vsub.f32 1.25, %v884
        %v1559 = vsub.f32 1.25, %v886
        %v1560 = vsub.f32 1.25, %v888
        %v1561 = vsub.f32 1.25, %v892
        %v1562 = vsub.f32 1.25, %v894
        %v1563 = vsub.f32 1.25, %v896
        %v1564 = vsub.f32 1.25, %v898
        %v1565 = vmax.f32 %v1501, 0.0
        %v1566 = vmax.f32 %v1502, 0.0
        %v1567 = vmax.f32 %v1503, 0.0
        %v1568 = vmax.f32 %v1504, 0.0
        %v1569 = vmax.f32 %v1505, 0.0
        %v1570 = vmax.f32 %v1506, 0.0
        %v1571 = vmax.f32 %v1507, 0.0
        %v1572 = vmax.f32 %v1508, 0.0
        %v1573 = vmax.f32 %v1509, 0.0
        %v1574 = vmax.f32 %v1510, 0.0
        %v1575 = vmax.f32 %v1511, 0.0
        %v1576 = vmax.f32 %v1512, 0.0
        %v1577 = vmax.f32 %v1513, 0.0
        %v1578 = vmax.f32 %v1514, 0.0
        %v1579 = vmax.f32 %v1515, 0.0
        %v1580 = vmax.f32 %v1516, 0.0
        %v1581 = vmax.f32 %v1517, 0.0
        %v1582 = vmax.f32 %v1518, 0.0
        %v1583 = vmax.f32 %v1519, 0.0
        %v1584 = vmax.f32 %v1520, 0.0
        %v1585 = vmax.f32 %v1521, 0.0
        %v1586 = vmax.f32 %v1522, 0.0
        %v1587 = vmax.f32 %v1523, 0.0
        %v1588 = vmax.f32 %v1524, 0.0
        %v1589 = vmax.f32 %v1525, 0.0
        %v1590 = vmax.f32 %v1526, 0.0
        %v1591 = vmax.f32 %v1527, 0.0
        %v1592 = vmax.f32 %v1528, 0.0
        %v1593 = vmax.f32 %v1529, 0.0
        %v1594 = vmax.f32 %v1530, 0.0
        %v1595 = vmax.f32 %v1531, 0.0
        %v1596 = vmax.f32 %v1532, 0.0
        %v1597 = vmax.f32 %v1533, 0.0
        %v1598 = vmax.f32 %v1534, 0.0
        %v1599 = vmax.f32 %v1535, 0.0
        %v1600 = vmax.f32 %v1536, 0.0
        %v1601 = vmax.f32 %v1537, 0.0
        %v1602 = vmax.f32 %v1538, 0.0
        %v1603 = vmax.f32 %v1539, 0.0
        %v1604 = vmax.f32 %v1540, 0.0
        %v1605 = vmax.f32 %v1541, 0.0
        %v1606 = vmax.f32 %v1542, 0.0
        %v1607 = vmax.f32 %v1543, 0.0
        %v1608 = vmax.f32 %v1544, 0.0
        %v1609 = vmax.f32 %v1545, 0.0
        %v1610 = vmax.f32 %v1546, 0.0
        %v1611 = vmax.f32 %v1547, 0.0
        %v1612 = vmax.f32 %v1548, 0.0
        %v1613 = vmax.f32 %v1549, 0.0
        %v1614 = vmax.f32 %v1550, 0.0
        %v1615 = vmax.f32 %v1551, 0.0
        %v1616 = vmax.f32 %v1552, 0.0
        %v1617 = vmax.f32 %v1553, 0.0
        %v1618 = vmax.f32 %v1554, 0.0
        %v1619 = vmax.f32 %v1555, 0.0
        %v1620 = vmax.f32 %v1556, 0.0
        %v1621 = vmax.f32 %v1557, 0.0
        %v1622 = vmax.f32 %v1558, 0.0
        %v1623 = vmax.f32 %v1559, 0.0
        %v1624 = vmax.f32 %v1560, 0.0
        %v1625 = vmax.f32 %v1561, 0.0
        %v1626 = vmax.f32 %v1562, 0.0
        %v1627 = vmax.f32 %v1563, 0.0
        %v1628 = vmax.f32 %v1564, 0.0
        %v1629 = vadd.f32 %v742, 0.25
        %v1630 = vadd.f32 %v744, 0.25
        %v1631 = vadd.f32 %v746, 0.25
        %v1632 = vadd.f32 %v748, 0.25
        %v1633 = vadd.f32 %v752, 0.25
        %v1634 = vadd.f32 %v754, 0.25
        %v1635 = vadd.f32 %v756, 0.25
        %v1636 = vadd.f32 %v758, 0.25
        %v1637 = vadd.f32 %v762, 0.25
        %v1638 = vadd.f32 %v764, 0.25
        %v1639 = vadd.f32 %v766, 0.25
        %v1640 = vadd.f32 %v768, 0.25
        %v1641 = vadd.f32 %v772, 0.25
        %v1642 = vadd.f32 %v774, 0.25
        %v1643 = vadd.f32 %v776, 0.25
        %v1644 = vadd.f32 %v778, 0.25
        %v1645 = vadd.f32 %v782, 0.25
        %v1646 = vadd.f32 %v784, 0.25
        %v1647 = vadd.f32 %v786, 0.25
        %v1648 = vadd.f32 %v788, 0.25
        %v1649 = vadd.f32 %v792, 0.25
        %v1650 = vadd.f32 %v794, 0.25
        %v1651 = vadd.f32 %v796, 0.25
        %v1652 = vadd.f32 %v798, 0.25
        %v1653 = vadd.f32 %v802, 0.25
        %v1654 = vadd.f32 %v804, 0.25
        %v1655 = vadd.f32 %v806, 0.25
        %v1656 = vadd.f32 %v808, 0.25
        %v1657 = vadd.f32 %v812, 0.25
        %v1658 = vadd.f32 %v814, 0.25
        %v1659 = vadd.f32 %v816, 0.25
        %v1660 = vadd.f32 %v818, 0.25
        %v1661 = vadd.f32 %v822, 0.25
        %v1662 = vadd.f32 %v824, 0.25
        %v1663 = vadd.f32 %v826, 0.25
        %v1664 = vadd.f32 %v828, 0.25
        %v1665 = vadd.f32 %v832, 0.25
        %v1666 = vadd.f32 %v834, 0.25
        %v1667 = vadd.f32 %v836, 0.25
        %v1668 = vadd.f32 %v838, 0.25
        %v1669 = vadd.f32 %v842, 0.25
        %v1670 = vadd.f32 %v844, 0.25
        %v1671 = vadd.f32 %v846, 0.25
        %v1672 = vadd.f32 %v848, 0.25
        %v1673 = vadd.f32 %v852, 0.25
        %v1674 = vadd.f32 %v854, 0.25
        %v1675 = vadd.f32 %v856, 0.25
        %v1676 = vadd.f32 %v858, 0.25
        %v1677 = vadd.f32 %v862, 0.25
        %v1678 = vadd.f32 %v864, 0.25
        %v1679 = vadd.f32 %v866, 0.25
        %v1680 = vadd.f32 %v868, 0.25
        %v1681 = vadd.f32 %v872, 0.25
        %v1682 = vadd.f32 %v874, 0.25
        %v1683 = vadd.f32 %v876, 0.25
        %v1684 = vadd.f32 %v878, 0.25
        %v1685 = vadd.f32 %v882, 0.25
        %v1686 = vadd.f32 %v884, 0.25
        %v1687 = vadd.f32 %v886, 0.25
        %v1688 = vadd.f32 %v888, 0.25
        %v1689 = vadd.f32 %v892, 0.25
        %v1690 = vadd.f32 %v894, 0.25
        %v1691 = vadd.f32 %v896, 0.25
        %v1692 = vadd.f32 %v898, 0.25
        %v1693 = vmax.f32 %v1629, 0.0
        %v1694 = vmax.f32 %v1630, 0.0
        %v1695 = vmax.f32 %v1631, 0.0
        %v1696 = vmax.f32 %v1632, 0.0
        %v1697 = vmax.f32 %v1633, 0.0
        %v1698 = vmax.f32 %v1634, 0.0
        %v1699 = vmax.f32 %v1635, 0.0
        %v1700 = vmax.f32 %v1636, 0.0
        %v1701 = vmax.f32 %v1637, 0.0
        %v1702 = vmax.f32 %v1638, 0.0
        %v1703 = vmax.f32 %v1639, 0.0
        %v1704 = vmax.f32 %v1640, 0.0
        %v1705 = vmax.f32 %v1641, 0.0
        %v1706 = vmax.f32 %v1642, 0.0
        %v1707 = vmax.f32 %v1643, 0.0
        %v1708 = vmax.f32 %v1644, 0.0
        %v1709 = vmax.f32 %v1645, 0.0
        %v1710 = vmax.f32 %v1646, 0.0
        %v1711 = vmax.f32 %v1647, 0.0
        %v1712 = vmax.f32 %v1648, 0.0
        %v1713 = vmax.f32 %v1649, 0.0
        %v1714 = vmax.f32 %v1650, 0.0
        %v1715 = vmax.f32 %v1651, 0.0
        %v1716 = vmax.f32 %v1652, 0.0
        %v1717 = vmax.f32 %v1653, 0.0
        %v1718 = vmax.f32 %v1654, 0.0
        %v1719 = vmax.f32 %v1655, 0.0
        %v1720 = vmax.f32 %v1656, 0.0
        %v1721 = vmax.f32 %v1657, 0.0
        %v1722 = vmax.f32 %v1658, 0.0
        %v1723 = vmax.f32 %v1659, 0.0
        %v1724 = vmax.f32 %v1660, 0.0
        %v1725 = vmax.f32 %v1661, 0.0
        %v1726 = vmax.f32 %v1662, 0.0
        %v1727 = vmax.f32 %v1663, 0.0
        %v1728 = vmax.f32 %v1664, 0.0
        %v1729 = vmax.f32 %v1665, 0.0
        %v1730 = vmax.f32 %v1666, 0.0
        %v1731 = vmax.f32 %v1667, 0.0
        %v1732 = vmax.f32 %v1668, 0.0
        %v1733 = vmax.f32 %v1669, 0.0
        %v1734 = vmax.f32 %v1670, 0.0
        %v1735 = vmax.f32 %v1671, 0.0
        %v1736 = vmax.f32 %v1672, 0.0
        %v1737 = vmax.f32 %v1673, 0.0
        %v1738 = vmax.f32 %v1674, 0.0
        %v1739 = vmax.f32 %v1675, 0.0
        %v1740 = vmax.f32 %v1676, 0.0
        %v1741 = vmax.f32 %v1677, 0.0
        %v1742 = vmax.f32 %v1678, 0.0
        %v1743 = vmax.f32 %v1679, 0.0
        %v1744 = vmax.f32 %v1680, 0.0
        %v1745 = vmax.f32 %v1681, 0.0
        %v1746 = vmax.f32 %v1682, 0.0
        %v1747 = vmax.f32 %v1683, 0.0
        %v1748 = vmax.f32 %v1684, 0.0
        %v1749 = vmax.f32 %v1685, 0.0
        %v1750 = vmax.f32 %v1686, 0.0
        %v1751 = vmax.f32 %v1687, 0.0
        %v1752 = vmax.f32 %v1688, 0.0
        %v1753 = vmax.f32 %v1689, 0.0
        %v1754 = vmax.f32 %v1690, 0.0
        %v1755 = vmax.f32 %v1691, 0.0
        %v1756 = vmax.f32 %v1692, 0.0
        %v1757 = vmul.f32 %v1565, -256.0
        %v1758 = vmul.f32 %v1566, -256.0
        %v1759 = vmul.f32 %v1567, -256.0
        %v1760 = vmul.f32 %v1568, -256.0
        %v1761 = vmul.f32 %v1569, -256.0
        %v1762 = vmul.f32 %v1570, -256.0
        %v1763 = vmul.f32 %v1571, -256.0
        %v1764 = vmul.f32 %v1572, -256.0
        %v1765 = vmul.f32 %v1573, -256.0
        %v1766 = vmul.f32 %v1574, -256.0
        %v1767 = vmul.f32 %v1575, -256.0
        %v1768 = vmul.f32 %v1576, -256.0
        %v1769 = vmul.f32 %v1577, -256.0
        %v1770 = vmul.f32 %v1578, -256.0
        %v1771 = vmul.f32 %v1579, -256.0
        %v1772 = vmul.f32 %v1580, -256.0
        %v1773 = vmul.f32 %v1581, -256.0
        %v1774 = vmul.f32 %v1582, -256.0
        %v1775 = vmul.f32 %v1583, -256.0
        %v1776 = vmul.f32 %v1584, -256.0
        %v1777 = vmul.f32 %v1585, -256.0
        %v1778 = vmul.f32 %v1586, -256.0
        %v1779 = vmul.f32 %v1587, -256.0
        %v1780 = vmul.f32 %v1588, -256.0
        %v1781 = vmul.f32 %v1589, -256.0
        %v1782 = vmul.f32 %v1590, -256.0
        %v1783 = vmul.f32 %v1591, -256.0
        %v1784 = vmul.f32 %v1592, -256.0
        %v1785 = vmul.f32 %v1593, -256.0
        %v1786 = vmul.f32 %v1594, -256.0
        %v1787 = vmul.f32 %v1595, -256.0
        %v1788 = vmul.f32 %v1596, -256.0
        %v1789 = vmul.f32 %v1597, -256.0
        %v1790 = vmul.f32 %v1598, -256.0
        %v1791 = vmul.f32 %v1599, -256.0
        %v1792 = vmul.f32 %v1600, -256.0
        %v1793 = vmul.f32 %v1601, -256.0
        %v1794 = vmul.f32 %v1602, -256.0
        %v1795 = vmul.f32 %v1603, -256.0
        %v1796 = vmul.f32 %v1604, -256.0
        %v1797 = vmul.f32 %v1605, -256.0
        %v1798 = vmul.f32 %v1606, -256.0
        %v1799 = vmul.f32 %v1607, -256.0
        %v1800 = vmul.f32 %v1608, -256.0
        %v1801 = vmul.f32 %v1609, -256.0
        %v1802 = vmul.f32 %v1610, -256.0
        %v1803 = vmul.f32 %v1611, -256.0
        %v1804 = vmul.f32 %v1612, -256.0
        %v1805 = vmul.f32 %v1613, -256.0
        %v1806 = vmul.f32 %v1614, -256.0
        %v1807 = vmul.f32 %v1615, -256.0
        %v1808 = vmul.f32 %v1616, -256.0
        %v1809 = vmul.f32 %v1617, -256.0
        %v1810 = vmul.f32 %v1618, -256.0
        %v1811 = vmul.f32 %v1619, -256.0
        %v1812 = vmul.f32 %v1620, -256.0
        %v1813 = vmul.f32 %v1621, -256.0
        %v1814 = vmul.f32 %v1622, -256.0
        %v1815 = vmul.f32 %v1623, -256.0
        %v1816 = vmul.f32 %v1624, -256.0
        %v1817 = vmul.f32 %v1625, -256.0
        %v1818 = vmul.f32 %v1626, -256.0
        %v1819 = vmul.f32 %v1627, -256.0
        %v1820 = vmul.f32 %v1628, -256.0
        %v1821 = vsub.f32 %v742, 0.75
        %v1822 = vsub.f32 %v744, 0.75
        %v1823 = vsub.f32 %v746, 0.75
        %v1824 = vsub.f32 %v748, 0.75
        %v1825 = vsub.f32 %v752, 0.75
        %v1826 = vsub.f32 %v754, 0.75
        %v1827 = vsub.f32 %v756, 0.75
        %v1828 = vsub.f32 %v758, 0.75
        %v1829 = vsub.f32 %v762, 0.75
        %v1830 = vsub.f32 %v764, 0.75
        %v1831 = vsub.f32 %v766, 0.75
        %v1832 = vsub.f32 %v768, 0.75
        %v1833 = vsub.f32 %v772, 0.75
        %v1834 = vsub.f32 %v774, 0.75
        %v1835 = vsub.f32 %v776, 0.75
        %v1836 = vsub.f32 %v778, 0.75
        %v1837 = vsub.f32 %v782, 0.75
        %v1838 = vsub.f32 %v784, 0.75
        %v1839 = vsub.f32 %v786, 0.75
        %v1840 = vsub.f32 %v788, 0.75
        %v1841 = vsub.f32 %v792, 0.75
        %v1842 = vsub.f32 %v794, 0.75
        %v1843 = vsub.f32 %v796, 0.75
        %v1844 = vsub.f32 %v798, 0.75
        %v1845 = vsub.f32 %v802, 0.75
        %v1846 = vsub.f32 %v804, 0.75
        %v1847 = vsub.f32 %v806, 0.75
        %v1848 = vsub.f32 %v808, 0.75
        %v1849 = vsub.f32 %v812, 0.75
        %v1850 = vsub.f32 %v814, 0.75
        %v1851 = vsub.f32 %v816, 0.75
        %v1852 = vsub.f32 %v818, 0.75
        %v1853 = vsub.f32 %v822, 0.75
        %v1854 = vsub.f32 %v824, 0.75
        %v1855 = vsub.f32 %v826, 0.75
        %v1856 = vsub.f32 %v828, 0.75
        %v1857 = vsub.f32 %v832, 0.75
        %v1858 = vsub.f32 %v834, 0.75
        %v1859 = vsub.f32 %v836, 0.75
        %v1860 = vsub.f32 %v838, 0.75
        %v1861 = vsub.f32 %v842, 0.75
        %v1862 = vsub.f32 %v844, 0.75
        %v1863 = vsub.f32 %v846, 0.75
        %v1864 = vsub.f32 %v848, 0.75
        %v1865 = vsub.f32 %v852, 0.75
        %v1866 = vsub.f32 %v854, 0.75
        %v1867 = vsub.f32 %v856, 0.75
        %v1868 = vsub.f32 %v858, 0.75
        %v1869 = vsub.f32 %v862, 0.75
        %v1870 = vsub.f32 %v864, 0.75
        %v1871 = vsub.f32 %v866, 0.75
        %v1872 = vsub.f32 %v868, 0.75
        %v1873 = vsub.f32 %v872, 0.75
        %v1874 = vsub.f32 %v874, 0.75
        %v1875 = vsub.f32 %v876, 0.75
        %v1876 = vsub.f32 %v878, 0.75
        %v1877 = vsub.f32 %v882, 0.75
        %v1878 = vsub.f32 %v884, 0.75
        %v1879 = vsub.f32 %v886, 0.75
        %v1880 = vsub.f32 %v888, 0.75
        %v1881 = vsub.f32 %v892, 0.75
        %v1882 = vsub.f32 %v894, 0.75
        %v1883 = vsub.f32 %v896, 0.75
        %v1884 = vsub.f32 %v898, 0.75
        %v1885 = vmul.f32 %v1757, %v1821
        %v1886 = vmul.f32 %v1758, %v1822
        %v1887 = vmul.f32 %v1759, %v1823
        %v1888 = vmul.f32 %v1760, %v1824
        %v1889 = vmul.f32 %v1761, %v1825
        %v1890 = vmul.f32 %v1762, %v1826
        %v1891 = vmul.f32 %v1763, %v1827
        %v1892 = vmul.f32 %v1764, %v1828
        %v1893 = vmul.f32 %v1765, %v1829
        %v1894 = vmul.f32 %v1766, %v1830
        %v1895 = vmul.f32 %v1767, %v1831
        %v1896 = vmul.f32 %v1768, %v1832
        %v1897 = vmul.f32 %v1769, %v1833
        %v1898 = vmul.f32 %v1770, %v1834
        %v1899 = vmul.f32 %v1771, %v1835
        %v1900 = vmul.f32 %v1772, %v1836
        %v1901 = vmul.f32 %v1773, %v1837
        %v1902 = vmul.f32 %v1774, %v1838
        %v1903 = vmul.f32 %v1775, %v1839
        %v1904 = vmul.f32 %v1776, %v1840
        %v1905 = vmul.f32 %v1777, %v1841
        %v1906 = vmul.f32 %v1778, %v1842
        %v1907 = vmul.f32 %v1779, %v1843
        %v1908 = vmul.f32 %v1780, %v1844
        %v1909 = vmul.f32 %v1781, %v1845
        %v1910 = vmul.f32 %v1782, %v1846
        %v1911 = vmul.f32 %v1783, %v1847
        %v1912 = vmul.f32 %v1784, %v1848
        %v1913 = vmul.f32 %v1785, %v1849
        %v1914 = vmul.f32 %v1786, %v1850
        %v1915 = vmul.f32 %v1787, %v1851
        %v1916 = vmul.f32 %v1788, %v1852
        %v1917 = vmul.f32 %v1789, %v1853
        %v1918 = vmul.f32 %v1790, %v1854
        %v1919 = vmul.f32 %v1791, %v1855
        %v1920 = vmul.f32 %v1792, %v1856
        %v1921 = vmul.f32 %v1793, %v1857
        %v1922 = vmul.f32 %v1794, %v1858
        %v1923 = vmul.f32 %v1795, %v1859
        %v1924 = vmul.f32 %v1796, %v1860
        %v1925 = vmul.f32 %v1797, %v1861
        %v1926 = vmul.f32 %v1798, %v1862
        %v1927 = vmul.f32 %v1799, %v1863
        %v1928 = vmul.f32 %v1800, %v1864
        %v1929 = vmul.f32 %v1801, %v1865
        %v1930 = vmul.f32 %v1802, %v1866
        %v1931 = vmul.f32 %v1803, %v1867
        %v1932 = vmul.f32 %v1804, %v1868
        %v1933 = vmul.f32 %v1805, %v1869
        %v1934 = vmul.f32 %v1806, %v1870
        %v1935 = vmul.f32 %v1807, %v1871
        %v1936 = vmul.f32 %v1808, %v1872
        %v1937 = vmul.f32 %v1809, %v1873
        %v1938 = vmul.f32 %v1810, %v1874
        %v1939 = vmul.f32 %v1811, %v1875
        %v1940 = vmul.f32 %v1812, %v1876
        %v1941 = vmul.f32 %v1813, %v1877
        %v1942 = vmul.f32 %v1814, %v1878
        %v1943 = vmul.f32 %v1815, %v1879
        %v1944 = vmul.f32 %v1816, %v1880
        %v1945 = vmul.f32 %v1817, %v1881
        %v1946 = vmul.f32 %v1818, %v1882
        %v1947 = vmul.f32 %v1819, %v1883
        %v1948 = vmul.f32 %v1820, %v1884
        %v1949 = vmul.f32 %v1693, 256.0
        %v1950 = vmul.f32 %v1694, 256.0
        %v1951 = vmul.f32 %v1695, 256.0
        %v1952 = vmul.f32 %v1696, 256.0
        %v1953 = vmul.f32 %v1697, 256.0
        %v1954 = vmul.f32 %v1698, 256.0
        %v1955 = vmul.f32 %v1699, 256.0
        %v1956 = vmul.f32 %v1700, 256.0
        %v1957 = vmul.f32 %v1701, 256.0
        %v1958 = vmul.f32 %v1702, 256.0
        %v1959 = vmul.f32 %v1703, 256.0
        %v1960 = vmul.f32 %v1704, 256.0
        %v1961 = vmul.f32 %v1705, 256.0
        %v1962 = vmul.f32 %v1706, 256.0
        %v1963 = vmul.f32 %v1707, 256.0
        %v1964 = vmul.f32 %v1708, 256.0
        %v1965 = vmul.f32 %v1709, 256.0
        %v1966 = vmul.f32 %v1710, 256.0
        %v1967 = vmul.f32 %v1711, 256.0
        %v1968 = vmul.f32 %v1712, 256.0
        %v1969 = vmul.f32 %v1713, 256.0
        %v1970 = vmul.f32 %v1714, 256.0
        %v1971 = vmul.f32 %v1715, 256.0
        %v1972 = vmul.f32 %v1716, 256.0
        %v1973 = vmul.f32 %v1717, 256.0
        %v1974 = vmul.f32 %v1718, 256.0
        %v1975 = vmul.f32 %v1719, 256.0
        %v1976 = vmul.f32 %v1720, 256.0
        %v1977 = vmul.f32 %v1721, 256.0
        %v1978 = vmul.f32 %v1722, 256.0
        %v1979 = vmul.f32 %v1723, 256.0
        %v1980 = vmul.f32 %v1724, 256.0
        %v1981 = vmul.f32 %v1725, 256.0
        %v1982 = vmul.f32 %v1726, 256.0
        %v1983 = vmul.f32 %v1727, 256.0
        %v1984 = vmul.f32 %v1728, 256.0
        %v1985 = vmul.f32 %v1729, 256.0
        %v1986 = vmul.f32 %v1730, 256.0
        %v1987 = vmul.f32 %v1731, 256.0
        %v1988 = vmul.f32 %v1732, 256.0
        %v1989 = vmul.f32 %v1733, 256.0
        %v1990 = vmul.f32 %v1734, 256.0
        %v1991 = vmul.f32 %v1735, 256.0
        %v1992 = vmul.f32 %v1736, 256.0
        %v1993 = vmul.f32 %v1737, 256.0
        %v1994 = vmul.f32 %v1738, 256.0
        %v1995 = vmul.f32 %v1739, 256.0
        %v1996 = vmul.f32 %v1740, 256.0
        %v1997 = vmul.f32 %v1741, 256.0
        %v1998 = vmul.f32 %v1742, 256.0
        %v1999 = vmul.f32 %v1743, 256.0
        %v2000 = vmul.f32 %v1744, 256.0
        %v2001 = vmul.f32 %v1745, 256.0
        %v2002 = vmul.f32 %v1746, 256.0
        %v2003 = vmul.f32 %v1747, 256.0
        %v2004 = vmul.f32 %v1748, 256.0
        %v2005 = vmul.f32 %v1749, 256.0
        %v2006 = vmul.f32 %v1750, 256.0
        %v2007 = vmul.f32 %v1751, 256.0
        %v2008 = vmul.f32 %v1752, 256.0
        %v2009 = vmul.f32 %v1753, 256.0
        %v2010 = vmul.f32 %v1754, 256.0
        %v2011 = vmul.f32 %v1755, 256.0
        %v2012 = vmul.f32 %v1756, 256.0
        %v2013 = vsub.f32 %v742, 0.25
        %v2014 = vsub.f32 %v744, 0.25
        %v2015 = vsub.f32 %v746, 0.25
        %v2016 = vsub.f32 %v748, 0.25
        %v2017 = vsub.f32 %v752, 0.25
        %v2018 = vsub.f32 %v754, 0.25
        %v2019 = vsub.f32 %v756, 0.25
        %v2020 = vsub.f32 %v758, 0.25
        %v2021 = vsub.f32 %v762, 0.25
        %v2022 = vsub.f32 %v764, 0.25
        %v2023 = vsub.f32 %v766, 0.25
        %v2024 = vsub.f32 %v768, 0.25
        %v2025 = vsub.f32 %v772, 0.25
        %v2026 = vsub.f32 %v774, 0.25
        %v2027 = vsub.f32 %v776, 0.25
        %v2028 = vsub.f32 %v778, 0.25
        %v2029 = vsub.f32 %v782, 0.25
        %v2030 = vsub.f32 %v784, 0.25
        %v2031 = vsub.f32 %v786, 0.25
        %v2032 = vsub.f32 %v788, 0.25
        %v2033 = vsub.f32 %v792, 0.25
        %v2034 = vsub.f32 %v794, 0.25
        %v2035 = vsub.f32 %v796, 0.25
        %v2036 = vsub.f32 %v798, 0.25
        %v2037 = vsub.f32 %v802, 0.25
        %v2038 = vsub.f32 %v804, 0.25
        %v2039 = vsub.f32 %v806, 0.25
        %v2040 = vsub.f32 %v808, 0.25
        %v2041 = vsub.f32 %v812, 0.25
        %v2042 = vsub.f32 %v814, 0.25
        %v2043 = vsub.f32 %v816, 0.25
        %v2044 = vsub.f32 %v818, 0.25
        %v2045 = vsub.f32 %v822, 0.25
        %v2046 = vsub.f32 %v824, 0.25
        %v2047 = vsub.f32 %v826, 0.25
        %v2048 = vsub.f32 %v828, 0.25
        %v2049 = vsub.f32 %v832, 0.25
        %v2050 = vsub.f32 %v834, 0.25
        %v2051 = vsub.f32 %v836, 0.25
        %v2052 = vsub.f32 %v838, 0.25
        %v2053 = vsub.f32 %v842, 0.25
        %v2054 = vsub.f32 %v844, 0.25
        %v2055 = vsub.f32 %v846, 0.25
        %v2056 = vsub.f32 %v848, 0.25
        %v2057 = vsub.f32 %v852, 0.25
        %v2058 = vsub.f32 %v854, 0.25
        %v2059 = vsub.f32 %v856, 0.25
        %v2060 = vsub.f32 %v858, 0.25
        %v2061 = vsub.f32 %v862, 0.25
        %v2062 = vsub.f32 %v864, 0.25
        %v2063 = vsub.f32 %v866, 0.25
        %v2064 = vsub.f32 %v868, 0.25
        %v2065 = vsub.f32 %v872, 0.25
        %v2066 = vsub.f32 %v874, 0.25
        %v2067 = vsub.f32 %v876, 0.25
        %v2068 = vsub.f32 %v878, 0.25
        %v2069 = vsub.f32 %v882, 0.25
        %v2070 = vsub.f32 %v884, 0.25
        %v2071 = vsub.f32 %v886, 0.25
        %v2072 = vsub.f32 %v888, 0.25
        %v2073 = vsub.f32 %v892, 0.25
        %v2074 = vsub.f32 %v894, 0.25
        %v2075 = vsub.f32 %v896, 0.25
        %v2076 = vsub.f32 %v898, 0.25
        %v2077 = vmul.f32 %v1949, %v2013
        %v2078 = vmul.f32 %v1950, %v2014
        %v2079 = vmul.f32 %v1951, %v2015
        %v2080 = vmul.f32 %v1952, %v2016
        %v2081 = vmul.f32 %v1953, %v2017
        %v2082 = vmul.f32 %v1954, %v2018
        %v2083 = vmul.f32 %v1955, %v2019
        %v2084 = vmul.f32 %v1956, %v2020
        %v2085 = vmul.f32 %v1957, %v2021
        %v2086 = vmul.f32 %v1958, %v2022
        %v2087 = vmul.f32 %v1959, %v2023
        %v2088 = vmul.f32 %v1960, %v2024
        %v2089 = vmul.f32 %v1961, %v2025
        %v2090 = vmul.f32 %v1962, %v2026
        %v2091 = vmul.f32 %v1963, %v2027
        %v2092 = vmul.f32 %v1964, %v2028
        %v2093 = vmul.f32 %v1965, %v2029
        %v2094 = vmul.f32 %v1966, %v2030
        %v2095 = vmul.f32 %v1967, %v2031
        %v2096 = vmul.f32 %v1968, %v2032
        %v2097 = vmul.f32 %v1969, %v2033
        %v2098 = vmul.f32 %v1970, %v2034
        %v2099 = vmul.f32 %v1971, %v2035
        %v2100 = vmul.f32 %v1972, %v2036
        %v2101 = vmul.f32 %v1973, %v2037
        %v2102 = vmul.f32 %v1974, %v2038
        %v2103 = vmul.f32 %v1975, %v2039
        %v2104 = vmul.f32 %v1976, %v2040
        %v2105 = vmul.f32 %v1977, %v2041
        %v2106 = vmul.f32 %v1978, %v2042
        %v2107 = vmul.f32 %v1979, %v2043
        %v2108 = vmul.f32 %v1980, %v2044
        %v2109 = vmul.f32 %v1981, %v2045
        %v2110 = vmul.f32 %v1982, %v2046
        %v2111 = vmul.f32 %v1983, %v2047
        %v2112 = vmul.f32 %v1984, %v2048
        %v2113 = vmul.f32 %v1985, %v2049
        %v2114 = vmul.f32 %v1986, %v2050
        %v2115 = vmul.f32 %v1987, %v2051
        %v2116 = vmul.f32 %v1988, %v2052
        %v2117 = vmul.f32 %v1989, %v2053
        %v2118 = vmul.f32 %v1990, %v2054
        %v2119 = vmul.f32 %v1991, %v2055
        %v2120 = vmul.f32 %v1992, %v2056
        %v2121 = vmul.f32 %v1993, %v2057
        %v2122 = vmul.f32 %v1994, %v2058
        %v2123 = vmul.f32 %v1995, %v2059
        %v2124 = vmul.f32 %v1996, %v2060
        %v2125 = vmul.f32 %v1997, %v2061
        %v2126 = vmul.f32 %v1998, %v2062
        %v2127 = vmul.f32 %v1999, %v2063
        %v2128 = vmul.f32 %v2000, %v2064
        %v2129 = vmul.f32 %v2001, %v2065
        %v2130 = vmul.f32 %v2002, %v2066
        %v2131 = vmul.f32 %v2003, %v2067
        %v2132 = vmul.f32 %v2004, %v2068
        %v2133 = vmul.f32 %v2005, %v2069
        %v2134 = vmul.f32 %v2006, %v2070
        %v2135 = vmul.f32 %v2007, %v2071
        %v2136 = vmul.f32 %v2008, %v2072
        %v2137 = vmul.f32 %v2009, %v2073
        %v2138 = vmul.f32 %v2010, %v2074
        %v2139 = vmul.f32 %v2011, %v2075
        %v2140 = vmul.f32 %v2012, %v2076
        %v2141 = vsel %vm1309, %v1885, -1e+30
        %v2142 = vsel %vm1310, %v1886, -1e+30
        %v2143 = vsel %vm1311, %v1887, -1e+30
        %v2144 = vsel %vm1312, %v1888, -1e+30
        %v2145 = vsel %vm1313, %v1889, -1e+30
        %v2146 = vsel %vm1314, %v1890, -1e+30
        %v2147 = vsel %vm1315, %v1891, -1e+30
        %v2148 = vsel %vm1316, %v1892, -1e+30
        %v2149 = vsel %vm1317, %v1893, -1e+30
        %v2150 = vsel %vm1318, %v1894, -1e+30
        %v2151 = vsel %vm1319, %v1895, -1e+30
        %v2152 = vsel %vm1320, %v1896, -1e+30
        %v2153 = vsel %vm1321, %v1897, -1e+30
        %v2154 = vsel %vm1322, %v1898, -1e+30
        %v2155 = vsel %vm1323, %v1899, -1e+30
        %v2156 = vsel %vm1324, %v1900, -1e+30
        %v2157 = vsel %vm1325, %v1901, -1e+30
        %v2158 = vsel %vm1326, %v1902, -1e+30
        %v2159 = vsel %vm1327, %v1903, -1e+30
        %v2160 = vsel %vm1328, %v1904, -1e+30
        %v2161 = vsel %vm1329, %v1905, -1e+30
        %v2162 = vsel %vm1330, %v1906, -1e+30
        %v2163 = vsel %vm1331, %v1907, -1e+30
        %v2164 = vsel %vm1332, %v1908, -1e+30
        %v2165 = vsel %vm1333, %v1909, -1e+30
        %v2166 = vsel %vm1334, %v1910, -1e+30
        %v2167 = vsel %vm1335, %v1911, -1e+30
        %v2168 = vsel %vm1336, %v1912, -1e+30
        %v2169 = vsel %vm1337, %v1913, -1e+30
        %v2170 = vsel %vm1338, %v1914, -1e+30
        %v2171 = vsel %vm1339, %v1915, -1e+30
        %v2172 = vsel %vm1340, %v1916, -1e+30
        %v2173 = vsel %vm1341, %v1917, -1e+30
        %v2174 = vsel %vm1342, %v1918, -1e+30
        %v2175 = vsel %vm1343, %v1919, -1e+30
        %v2176 = vsel %vm1344, %v1920, -1e+30
        %v2177 = vsel %vm1345, %v1921, -1e+30
        %v2178 = vsel %vm1346, %v1922, -1e+30
        %v2179 = vsel %vm1347, %v1923, -1e+30
        %v2180 = vsel %vm1348, %v1924, -1e+30
        %v2181 = vsel %vm1349, %v1925, -1e+30
        %v2182 = vsel %vm1350, %v1926, -1e+30
        %v2183 = vsel %vm1351, %v1927, -1e+30
        %v2184 = vsel %vm1352, %v1928, -1e+30
        %v2185 = vsel %vm1353, %v1929, -1e+30
        %v2186 = vsel %vm1354, %v1930, -1e+30
        %v2187 = vsel %vm1355, %v1931, -1e+30
        %v2188 = vsel %vm1356, %v1932, -1e+30
        %v2189 = vsel %vm1357, %v1933, -1e+30
        %v2190 = vsel %vm1358, %v1934, -1e+30
        %v2191 = vsel %vm1359, %v1935, -1e+30
        %v2192 = vsel %vm1360, %v1936, -1e+30
        %v2193 = vsel %vm1361, %v1937, -1e+30
        %v2194 = vsel %vm1362, %v1938, -1e+30
        %v2195 = vsel %vm1363, %v1939, -1e+30
        %v2196 = vsel %vm1364, %v1940, -1e+30
        %v2197 = vsel %vm1365, %v1941, -1e+30
        %v2198 = vsel %vm1366, %v1942, -1e+30
        %v2199 = vsel %vm1367, %v1943, -1e+30
        %v2200 = vsel %vm1368, %v1944, -1e+30
        %v2201 = vsel %vm1369, %v1945, -1e+30
        %v2202 = vsel %vm1370, %v1946, -1e+30
        %v2203 = vsel %vm1371, %v1947, -1e+30
        %v2204 = vsel %vm1372, %v1948, -1e+30
        %v2205 = vsel %vm1437, %v2077, -1e+30
        %v2206 = vsel %vm1438, %v2078, -1e+30
        %v2207 = vsel %vm1439, %v2079, -1e+30
        %v2208 = vsel %vm1440, %v2080, -1e+30
        %v2209 = vsel %vm1441, %v2081, -1e+30
        %v2210 = vsel %vm1442, %v2082, -1e+30
        %v2211 = vsel %vm1443, %v2083, -1e+30
        %v2212 = vsel %vm1444, %v2084, -1e+30
        %v2213 = vsel %vm1445, %v2085, -1e+30
        %v2214 = vsel %vm1446, %v2086, -1e+30
        %v2215 = vsel %vm1447, %v2087, -1e+30
        %v2216 = vsel %vm1448, %v2088, -1e+30
        %v2217 = vsel %vm1449, %v2089, -1e+30
        %v2218 = vsel %vm1450, %v2090, -1e+30
        %v2219 = vsel %vm1451, %v2091, -1e+30
        %v2220 = vsel %vm1452, %v2092, -1e+30
        %v2221 = vsel %vm1453, %v2093, -1e+30
        %v2222 = vsel %vm1454, %v2094, -1e+30
        %v2223 = vsel %vm1455, %v2095, -1e+30
        %v2224 = vsel %vm1456, %v2096, -1e+30
        %v2225 = vsel %vm1457, %v2097, -1e+30
        %v2226 = vsel %vm1458, %v2098, -1e+30
        %v2227 = vsel %vm1459, %v2099, -1e+30
        %v2228 = vsel %vm1460, %v2100, -1e+30
        %v2229 = vsel %vm1461, %v2101, -1e+30
        %v2230 = vsel %vm1462, %v2102, -1e+30
        %v2231 = vsel %vm1463, %v2103, -1e+30
        %v2232 = vsel %vm1464, %v2104, -1e+30
        %v2233 = vsel %vm1465, %v2105, -1e+30
        %v2234 = vsel %vm1466, %v2106, -1e+30
        %v2235 = vsel %vm1467, %v2107, -1e+30
        %v2236 = vsel %vm1468, %v2108, -1e+30
        %v2237 = vsel %vm1469, %v2109, -1e+30
        %v2238 = vsel %vm1470, %v2110, -1e+30
        %v2239 = vsel %vm1471, %v2111, -1e+30
        %v2240 = vsel %vm1472, %v2112, -1e+30
        %v2241 = vsel %vm1473, %v2113, -1e+30
        %v2242 = vsel %vm1474, %v2114, -1e+30
        %v2243 = vsel %vm1475, %v2115, -1e+30
        %v2244 = vsel %vm1476, %v2116, -1e+30
        %v2245 = vsel %vm1477, %v2117, -1e+30
        %v2246 = vsel %vm1478, %v2118, -1e+30
        %v2247 = vsel %vm1479, %v2119, -1e+30
        %v2248 = vsel %vm1480, %v2120, -1e+30
        %v2249 = vsel %vm1481, %v2121, -1e+30
        %v2250 = vsel %vm1482, %v2122, -1e+30
        %v2251 = vsel %vm1483, %v2123, -1e+30
        %v2252 = vsel %vm1484, %v2124, -1e+30
        %v2253 = vsel %vm1485, %v2125, -1e+30
        %v2254 = vsel %vm1486, %v2126, -1e+30
        %v2255 = vsel %vm1487, %v2127, -1e+30
        %v2256 = vsel %vm1488, %v2128, -1e+30
        %v2257 = vsel %vm1489, %v2129, -1e+30
        %v2258 = vsel %vm1490, %v2130, -1e+30
        %v2259 = vsel %vm1491, %v2131, -1e+30
        %v2260 = vsel %vm1492, %v2132, -1e+30
        %v2261 = vsel %vm1493, %v2133, -1e+30
        %v2262 = vsel %vm1494, %v2134, -1e+30
        %v2263 = vsel %vm1495, %v2135, -1e+30
        %v2264 = vsel %vm1496, %v2136, -1e+30
        %v2265 = vsel %vm1497, %v2137, -1e+30
        %v2266 = vsel %vm1498, %v2138, -1e+30
        %v2267 = vsel %vm1499, %v2139, -1e+30
        %v2268 = vsel %vm1500, %v2140, -1e+30
        %v2269 = vmax.f32 %v2141, %v2145
        %v2270 = vmax.f32 %v2143, %v2147
        %v2271 = vmax.f32 %v2269, %v2149
        %v2272 = vmax.f32 %v2270, %v2151
        %v2273 = vmax.f32 %v2271, %v2153
        %v2274 = vmax.f32 %v2272, %v2155
        %v2275 = vmax.f32 %v2273, %v2157
        %v2276 = vmax.f32 %v2274, %v2159
        %v2277 = vmax.f32 %v2275, %v2161
        %v2278 = vmax.f32 %v2276, %v2163
        %v2279 = vmax.f32 %v2277, %v2165
        %v2280 = vmax.f32 %v2278, %v2167
        %v2281 = vmax.f32 %v2279, %v2169
        %v2282 = vmax.f32 %v2280, %v2171
        %v2283 = vmax.f32 %v2281, %v2173
        %v2284 = vmax.f32 %v2282, %v2175
        %v2285 = vmax.f32 %v2283, %v2177
        %v2286 = vmax.f32 %v2284, %v2179
        %v2287 = vmax.f32 %v2285, %v2181
        %v2288 = vmax.f32 %v2286, %v2183
        %v2289 = vmax.f32 %v2287, %v2185
        %v2290 = vmax.f32 %v2288, %v2187
        %v2291 = vmax.f32 %v2289, %v2189
        %v2292 = vmax.f32 %v2290, %v2191
        %v2293 = vmax.f32 %v2291, %v2193
        %v2294 = vmax.f32 %v2292, %v2195
        %v2295 = vmax.f32 %v2293, %v2197
        %v2296 = vmax.f32 %v2294, %v2199
        %v2297 = vmax.f32 %v2295, %v2201
        %v2298 = vmax.f32 %v2296, %v2203
        %v2299 = vmax.f32 %v2297, %v2298
        %v2300 = vrot.slane %v2299, 4
        %v2301 = vmax.f32 %v2299, %v2300
        %v2302 = vrot.slane %v2301, 2
        %v2303 = vmax.f32 %v2301, %v2302
        %v2304 = vrot.slane %v2303, 1
        %v2305 = vmax.f32 %v2303, %v2304
        %v2306 = vmax.f32 %v2142, %v2146
        %v2307 = vmax.f32 %v2144, %v2148
        %v2308 = vmax.f32 %v2306, %v2150
        %v2309 = vmax.f32 %v2307, %v2152
        %v2310 = vmax.f32 %v2308, %v2154
        %v2311 = vmax.f32 %v2309, %v2156
        %v2312 = vmax.f32 %v2310, %v2158
        %v2313 = vmax.f32 %v2311, %v2160
        %v2314 = vmax.f32 %v2312, %v2162
        %v2315 = vmax.f32 %v2313, %v2164
        %v2316 = vmax.f32 %v2314, %v2166
        %v2317 = vmax.f32 %v2315, %v2168
        %v2318 = vmax.f32 %v2316, %v2170
        %v2319 = vmax.f32 %v2317, %v2172
        %v2320 = vmax.f32 %v2318, %v2174
        %v2321 = vmax.f32 %v2319, %v2176
        %v2322 = vmax.f32 %v2320, %v2178
        %v2323 = vmax.f32 %v2321, %v2180
        %v2324 = vmax.f32 %v2322, %v2182
        %v2325 = vmax.f32 %v2323, %v2184
        %v2326 = vmax.f32 %v2324, %v2186
        %v2327 = vmax.f32 %v2325, %v2188
        %v2328 = vmax.f32 %v2326, %v2190
        %v2329 = vmax.f32 %v2327, %v2192
        %v2330 = vmax.f32 %v2328, %v2194
        %v2331 = vmax.f32 %v2329, %v2196
        %v2332 = vmax.f32 %v2330, %v2198
        %v2333 = vmax.f32 %v2331, %v2200
        %v2334 = vmax.f32 %v2332, %v2202
        %v2335 = vmax.f32 %v2333, %v2204
        %v2336 = vmax.f32 %v2334, %v2335
        %v2337 = vrot.slane %v2336, 4
        %v2338 = vmax.f32 %v2336, %v2337
        %v2339 = vrot.slane %v2338, 2
        %v2340 = vmax.f32 %v2338, %v2339
        %v2341 = vrot.slane %v2340, 1
        %v2342 = vmax.f32 %v2340, %v2341
        %v2343 = vmax.f32 %v2205, %v2209
        %v2344 = vmax.f32 %v2207, %v2211
        %v2345 = vmax.f32 %v2343, %v2213
        %v2346 = vmax.f32 %v2344, %v2215
        %v2347 = vmax.f32 %v2345, %v2217
        %v2348 = vmax.f32 %v2346, %v2219
        %v2349 = vmax.f32 %v2347, %v2221
        %v2350 = vmax.f32 %v2348, %v2223
        %v2351 = vmax.f32 %v2349, %v2225
        %v2352 = vmax.f32 %v2350, %v2227
        %v2353 = vmax.f32 %v2351, %v2229
        %v2354 = vmax.f32 %v2352, %v2231
        %v2355 = vmax.f32 %v2353, %v2233
        %v2356 = vmax.f32 %v2354, %v2235
        %v2357 = vmax.f32 %v2355, %v2237
        %v2358 = vmax.f32 %v2356, %v2239
        %v2359 = vmax.f32 %v2357, %v2241
        %v2360 = vmax.f32 %v2358, %v2243
        %v2361 = vmax.f32 %v2359, %v2245
        %v2362 = vmax.f32 %v2360, %v2247
        %v2363 = vmax.f32 %v2361, %v2249
        %v2364 = vmax.f32 %v2362, %v2251
        %v2365 = vmax.f32 %v2363, %v2253
        %v2366 = vmax.f32 %v2364, %v2255
        %v2367 = vmax.f32 %v2365, %v2257
        %v2368 = vmax.f32 %v2366, %v2259
        %v2369 = vmax.f32 %v2367, %v2261
        %v2370 = vmax.f32 %v2368, %v2263
        %v2371 = vmax.f32 %v2369, %v2265
        %v2372 = vmax.f32 %v2370, %v2267
        %v2373 = vmax.f32 %v2371, %v2372
        %v2374 = vrot.slane %v2373, 4
        %v2375 = vmax.f32 %v2373, %v2374
        %v2376 = vrot.slane %v2375, 2
        %v2377 = vmax.f32 %v2375, %v2376
        %v2378 = vrot.slane %v2377, 1
        %v2379 = vmax.f32 %v2377, %v2378
        %v2380 = vmax.f32 %v2206, %v2210
        %v2381 = vmax.f32 %v2208, %v2212
        %v2382 = vmax.f32 %v2380, %v2214
        %v2383 = vmax.f32 %v2381, %v2216
        %v2384 = vmax.f32 %v2382, %v2218
        %v2385 = vmax.f32 %v2383, %v2220
        %v2386 = vmax.f32 %v2384, %v2222
        %v2387 = vmax.f32 %v2385, %v2224
        %v2388 = vmax.f32 %v2386, %v2226
        %v2389 = vmax.f32 %v2387, %v2228
        %v2390 = vmax.f32 %v2388, %v2230
        %v2391 = vmax.f32 %v2389, %v2232
        %v2392 = vmax.f32 %v2390, %v2234
        %v2393 = vmax.f32 %v2391, %v2236
        %v2394 = vmax.f32 %v2392, %v2238
        %v2395 = vmax.f32 %v2393, %v2240
        %v2396 = vmax.f32 %v2394, %v2242
        %v2397 = vmax.f32 %v2395, %v2244
        %v2398 = vmax.f32 %v2396, %v2246
        %v2399 = vmax.f32 %v2397, %v2248
        %v2400 = vmax.f32 %v2398, %v2250
        %v2401 = vmax.f32 %v2399, %v2252
        %v2402 = vmax.f32 %v2400, %v2254
        %v2403 = vmax.f32 %v2401, %v2256
        %v2404 = vmax.f32 %v2402, %v2258
        %v2405 = vmax.f32 %v2403, %v2260
        %v2406 = vmax.f32 %v2404, %v2262
        %v2407 = vmax.f32 %v2405, %v2264
        %v2408 = vmax.f32 %v2406, %v2266
        %v2409 = vmax.f32 %v2407, %v2268
        %v2410 = vmax.f32 %v2408, %v2409
        %v2411 = vrot.slane %v2410, 4
        %v2412 = vmax.f32 %v2410, %v2411
        %v2413 = vrot.slane %v2412, 2
        %v2414 = vmax.f32 %v2412, %v2413
        %v2415 = vrot.slane %v2414, 1
        %v2416 = vmax.f32 %v2414, %v2415
        %v2417 = vsub.f32 %v2141, %v2305
        %v2418 = vsub.f32 %v2142, %v2342
        %v2419 = vsub.f32 %v2143, %v2305
        %v2420 = vsub.f32 %v2144, %v2342
        %v2421 = vsub.f32 %v2145, %v2305
        %v2422 = vsub.f32 %v2146, %v2342
        %v2423 = vsub.f32 %v2147, %v2305
        %v2424 = vsub.f32 %v2148, %v2342
        %v2425 = vsub.f32 %v2149, %v2305
        %v2426 = vsub.f32 %v2150, %v2342
        %v2427 = vsub.f32 %v2151, %v2305
        %v2428 = vsub.f32 %v2152, %v2342
        %v2429 = vsub.f32 %v2153, %v2305
        %v2430 = vsub.f32 %v2154, %v2342
        %v2431 = vsub.f32 %v2155, %v2305
        %v2432 = vsub.f32 %v2156, %v2342
        %v2433 = vsub.f32 %v2157, %v2305
        %v2434 = vsub.f32 %v2158, %v2342
        %v2435 = vsub.f32 %v2159, %v2305
        %v2436 = vsub.f32 %v2160, %v2342
        %v2437 = vsub.f32 %v2161, %v2305
        %v2438 = vsub.f32 %v2162, %v2342
        %v2439 = vsub.f32 %v2163, %v2305
        %v2440 = vsub.f32 %v2164, %v2342
        %v2441 = vsub.f32 %v2165, %v2305
        %v2442 = vsub.f32 %v2166, %v2342
        %v2443 = vsub.f32 %v2167, %v2305
        %v2444 = vsub.f32 %v2168, %v2342
        %v2445 = vsub.f32 %v2169, %v2305
        %v2446 = vsub.f32 %v2170, %v2342
        %v2447 = vsub.f32 %v2171, %v2305
        %v2448 = vsub.f32 %v2172, %v2342
        %v2449 = vsub.f32 %v2173, %v2305
        %v2450 = vsub.f32 %v2174, %v2342
        %v2451 = vsub.f32 %v2175, %v2305
        %v2452 = vsub.f32 %v2176, %v2342
        %v2453 = vsub.f32 %v2177, %v2305
        %v2454 = vsub.f32 %v2178, %v2342
        %v2455 = vsub.f32 %v2179, %v2305
        %v2456 = vsub.f32 %v2180, %v2342
        %v2457 = vsub.f32 %v2181, %v2305
        %v2458 = vsub.f32 %v2182, %v2342
        %v2459 = vsub.f32 %v2183, %v2305
        %v2460 = vsub.f32 %v2184, %v2342
        %v2461 = vsub.f32 %v2185, %v2305
        %v2462 = vsub.f32 %v2186, %v2342
        %v2463 = vsub.f32 %v2187, %v2305
        %v2464 = vsub.f32 %v2188, %v2342
        %v2465 = vsub.f32 %v2189, %v2305
        %v2466 = vsub.f32 %v2190, %v2342
        %v2467 = vsub.f32 %v2191, %v2305
        %v2468 = vsub.f32 %v2192, %v2342
        %v2469 = vsub.f32 %v2193, %v2305
        %v2470 = vsub.f32 %v2194, %v2342
        %v2471 = vsub.f32 %v2195, %v2305
        %v2472 = vsub.f32 %v2196, %v2342
        %v2473 = vsub.f32 %v2197, %v2305
        %v2474 = vsub.f32 %v2198, %v2342
        %v2475 = vsub.f32 %v2199, %v2305
        %v2476 = vsub.f32 %v2200, %v2342
        %v2477 = vsub.f32 %v2201, %v2305
        %v2478 = vsub.f32 %v2202, %v2342
        %v2479 = vsub.f32 %v2203, %v2305
        %v2480 = vsub.f32 %v2204, %v2342
        %v2481 = vmul.f32 %v2417, 1.442695
        %v2482 = vpow.pop %v2481
        %v2483 = vmul.f32 %v2418, 1.442695
        %v2484 = vpow.pop %v2483
        %v2485 = vmul.f32 %v2419, 1.442695
        %v2486 = vpow.pop %v2485
        %v2487 = vmul.f32 %v2420, 1.442695
        %v2488 = vpow.pop %v2487
        %v2489 = vmul.f32 %v2421, 1.442695
        %v2490 = vpow.pop %v2489
        %v2491 = vmul.f32 %v2422, 1.442695
        %v2492 = vpow.pop %v2491
        %v2493 = vmul.f32 %v2423, 1.442695
        %v2494 = vpow.pop %v2493
        %v2495 = vmul.f32 %v2424, 1.442695
        %v2496 = vpow.pop %v2495
        %v2497 = vmul.f32 %v2425, 1.442695
        %v2498 = vpow.pop %v2497
        %v2499 = vmul.f32 %v2426, 1.442695
        %v2500 = vpow.pop %v2499
        %v2501 = vmul.f32 %v2427, 1.442695
        %v2502 = vpow.pop %v2501
        %v2503 = vmul.f32 %v2428, 1.442695
        %v2504 = vpow.pop %v2503
        %v2505 = vmul.f32 %v2429, 1.442695
        %v2506 = vpow.pop %v2505
        %v2507 = vmul.f32 %v2430, 1.442695
        %v2508 = vpow.pop %v2507
        %v2509 = vmul.f32 %v2431, 1.442695
        %v2510 = vpow.pop %v2509
        %v2511 = vmul.f32 %v2432, 1.442695
        %v2512 = vpow.pop %v2511
        %v2513 = vmul.f32 %v2433, 1.442695
        %v2514 = vpow.pop %v2513
        %v2515 = vmul.f32 %v2434, 1.442695
        %v2516 = vpow.pop %v2515
        %v2517 = vmul.f32 %v2435, 1.442695
        %v2518 = vpow.pop %v2517
        %v2519 = vmul.f32 %v2436, 1.442695
        %v2520 = vpow.pop %v2519
        %v2521 = vmul.f32 %v2437, 1.442695
        %v2522 = vpow.pop %v2521
        %v2523 = vmul.f32 %v2438, 1.442695
        %v2524 = vpow.pop %v2523
        %v2525 = vmul.f32 %v2439, 1.442695
        %v2526 = vpow.pop %v2525
        %v2527 = vmul.f32 %v2440, 1.442695
        %v2528 = vpow.pop %v2527
        %v2529 = vmul.f32 %v2441, 1.442695
        %v2530 = vpow.pop %v2529
        %v2531 = vmul.f32 %v2442, 1.442695
        %v2532 = vpow.pop %v2531
        %v2533 = vmul.f32 %v2443, 1.442695
        %v2534 = vpow.pop %v2533
        %v2535 = vmul.f32 %v2444, 1.442695
        %v2536 = vpow.pop %v2535
        %v2537 = vmul.f32 %v2445, 1.442695
        %v2538 = vpow.pop %v2537
        %v2539 = vmul.f32 %v2446, 1.442695
        %v2540 = vpow.pop %v2539
        %v2541 = vmul.f32 %v2447, 1.442695
        %v2542 = vpow.pop %v2541
        %v2543 = vmul.f32 %v2448, 1.442695
        %v2544 = vpow.pop %v2543
        %v2545 = vmul.f32 %v2449, 1.442695
        %v2546 = vpow.pop %v2545
        %v2547 = vmul.f32 %v2450, 1.442695
        %v2548 = vpow.pop %v2547
        %v2549 = vmul.f32 %v2451, 1.442695
        %v2550 = vpow.pop %v2549
        %v2551 = vmul.f32 %v2452, 1.442695
        %v2552 = vpow.pop %v2551
        %v2553 = vmul.f32 %v2453, 1.442695
        %v2554 = vpow.pop %v2553
        %v2555 = vmul.f32 %v2454, 1.442695
        %v2556 = vpow.pop %v2555
        %v2557 = vmul.f32 %v2455, 1.442695
        %v2558 = vpow.pop %v2557
        %v2559 = vmul.f32 %v2456, 1.442695
        %v2560 = vpow.pop %v2559
        %v2561 = vmul.f32 %v2457, 1.442695
        %v2562 = vpow.pop %v2561
        %v2563 = vmul.f32 %v2458, 1.442695
        %v2564 = vpow.pop %v2563
        %v2565 = vmul.f32 %v2459, 1.442695
        %v2566 = vpow.pop %v2565
        %v2567 = vmul.f32 %v2460, 1.442695
        %v2568 = vpow.pop %v2567
        %v2569 = vmul.f32 %v2461, 1.442695
        %v2570 = vpow.pop %v2569
        %v2571 = vmul.f32 %v2462, 1.442695
        %v2572 = vpow.pop %v2571
        %v2573 = vmul.f32 %v2463, 1.442695
        %v2574 = vpow.pop %v2573
        %v2575 = vmul.f32 %v2464, 1.442695
        %v2576 = vpow.pop %v2575
        %v2577 = vmul.f32 %v2465, 1.442695
        %v2578 = vpow.pop %v2577
        %v2579 = vmul.f32 %v2466, 1.442695
        %v2580 = vpow.pop %v2579
        %v2581 = vmul.f32 %v2467, 1.442695
        %v2582 = vpow.pop %v2581
        %v2583 = vmul.f32 %v2468, 1.442695
        %v2584 = vpow.pop %v2583
        %v2585 = vmul.f32 %v2469, 1.442695
        %v2586 = vpow.pop %v2585
        %v2587 = vmul.f32 %v2470, 1.442695
        %v2588 = vpow.pop %v2587
        %v2589 = vmul.f32 %v2471, 1.442695
        %v2590 = vpow.pop %v2589
        %v2591 = vmul.f32 %v2472, 1.442695
        %v2592 = vpow.pop %v2591
        %v2593 = vmul.f32 %v2473, 1.442695
        %v2594 = vpow.pop %v2593
        %v2595 = vmul.f32 %v2474, 1.442695
        %v2596 = vpow.pop %v2595
        %v2597 = vmul.f32 %v2475, 1.442695
        %v2598 = vpow.pop %v2597
        %v2599 = vmul.f32 %v2476, 1.442695
        %v2600 = vpow.pop %v2599
        %v2601 = vmul.f32 %v2477, 1.442695
        %v2602 = vpow.pop %v2601
        %v2603 = vmul.f32 %v2478, 1.442695
        %v2604 = vpow.pop %v2603
        %v2605 = vmul.f32 %v2479, 1.442695
        %v2606 = vpow.pop %v2605
        %v2607 = vmul.f32 %v2480, 1.442695
        %v2608 = vpow.pop %v2607
        %v2609 = vadd.f32 %v2482, %v2486
        %v2610 = vadd.f32 %v2609, %v2490
        %v2611 = vadd.f32 %v2610, %v2494
        %v2612 = vadd.f32 %v2611, %v2498
        %v2613 = vadd.f32 %v2612, %v2502
        %v2614 = vadd.f32 %v2613, %v2506
        %v2615 = vadd.f32 %v2614, %v2510
        %v2616 = vadd.f32 %v2615, %v2514
        %v2617 = vadd.f32 %v2616, %v2518
        %v2618 = vadd.f32 %v2617, %v2522
        %v2619 = vadd.f32 %v2618, %v2526
        %v2620 = vadd.f32 %v2619, %v2530
        %v2621 = vadd.f32 %v2620, %v2534
        %v2622 = vadd.f32 %v2621, %v2538
        %v2623 = vadd.f32 %v2622, %v2542
        %v2624 = vadd.f32 %v2623, %v2546
        %v2625 = vadd.f32 %v2624, %v2550
        %v2626 = vadd.f32 %v2625, %v2554
        %v2627 = vadd.f32 %v2626, %v2558
        %v2628 = vadd.f32 %v2627, %v2562
        %v2629 = vadd.f32 %v2628, %v2566
        %v2630 = vadd.f32 %v2629, %v2570
        %v2631 = vadd.f32 %v2630, %v2574
        %v2632 = vadd.f32 %v2631, %v2578
        %v2633 = vadd.f32 %v2632, %v2582
        %v2634 = vadd.f32 %v2633, %v2586
        %v2635 = vadd.f32 %v2634, %v2590
        %v2636 = vadd.f32 %v2635, %v2594
        %v2637 = vadd.f32 %v2636, %v2598
        %v2638 = vadd.f32 %v2637, %v2602
        %v2639 = vadd.f32 %v2638, %v2606
        %v2640 = vrot.slane %v2639, 4
        %v2641 = vadd.f32 %v2639, %v2640
        %v2642 = vrot.slane %v2641, 2
        %v2643 = vadd.f32 %v2641, %v2642
        %v2644 = vrot.slane %v2643, 1
        %v2645 = vadd.f32 %v2643, %v2644
        %v2646 = vadd.f32 %v2484, %v2488
        %v2647 = vadd.f32 %v2646, %v2492
        %v2648 = vadd.f32 %v2647, %v2496
        %v2649 = vadd.f32 %v2648, %v2500
        %v2650 = vadd.f32 %v2649, %v2504
        %v2651 = vadd.f32 %v2650, %v2508
        %v2652 = vadd.f32 %v2651, %v2512
        %v2653 = vadd.f32 %v2652, %v2516
        %v2654 = vadd.f32 %v2653, %v2520
        %v2655 = vadd.f32 %v2654, %v2524
        %v2656 = vadd.f32 %v2655, %v2528
        %v2657 = vadd.f32 %v2656, %v2532
        %v2658 = vadd.f32 %v2657, %v2536
        %v2659 = vadd.f32 %v2658, %v2540
        %v2660 = vadd.f32 %v2659, %v2544
        %v2661 = vadd.f32 %v2660, %v2548
        %v2662 = vadd.f32 %v2661, %v2552
        %v2663 = vadd.f32 %v2662, %v2556
        %v2664 = vadd.f32 %v2663, %v2560
        %v2665 = vadd.f32 %v2664, %v2564
        %v2666 = vadd.f32 %v2665, %v2568
        %v2667 = vadd.f32 %v2666, %v2572
        %v2668 = vadd.f32 %v2667, %v2576
        %v2669 = vadd.f32 %v2668, %v2580
        %v2670 = vadd.f32 %v2669, %v2584
        %v2671 = vadd.f32 %v2670, %v2588
        %v2672 = vadd.f32 %v2671, %v2592
        %v2673 = vadd.f32 %v2672, %v2596
        %v2674 = vadd.f32 %v2673, %v2600
        %v2675 = vadd.f32 %v2674, %v2604
        %v2676 = vadd.f32 %v2675, %v2608
        %v2677 = vrot.slane %v2676, 4
        %v2678 = vadd.f32 %v2676, %v2677
        %v2679 = vrot.slane %v2678, 2
        %v2680 = vadd.f32 %v2678, %v2679
        %v2681 = vrot.slane %v2680, 1
        %v2682 = vadd.f32 %v2680, %v2681
        %v2683 = vsub.f32 %v2205, %v2379
        %v2684 = vsub.f32 %v2206, %v2416
        %v2685 = vsub.f32 %v2207, %v2379
        %v2686 = vsub.f32 %v2208, %v2416
        %v2687 = vsub.f32 %v2209, %v2379
        %v2688 = vsub.f32 %v2210, %v2416
        %v2689 = vsub.f32 %v2211, %v2379
        %v2690 = vsub.f32 %v2212, %v2416
        %v2691 = vsub.f32 %v2213, %v2379
        %v2692 = vsub.f32 %v2214, %v2416
        %v2693 = vsub.f32 %v2215, %v2379
        %v2694 = vsub.f32 %v2216, %v2416
        %v2695 = vsub.f32 %v2217, %v2379
        %v2696 = vsub.f32 %v2218, %v2416
        %v2697 = vsub.f32 %v2219, %v2379
        %v2698 = vsub.f32 %v2220, %v2416
        %v2699 = vsub.f32 %v2221, %v2379
        %v2700 = vsub.f32 %v2222, %v2416
        %v2701 = vsub.f32 %v2223, %v2379
        %v2702 = vsub.f32 %v2224, %v2416
        %v2703 = vsub.f32 %v2225, %v2379
        %v2704 = vsub.f32 %v2226, %v2416
        %v2705 = vsub.f32 %v2227, %v2379
        %v2706 = vsub.f32 %v2228, %v2416
        %v2707 = vsub.f32 %v2229, %v2379
        %v2708 = vsub.f32 %v2230, %v2416
        %v2709 = vsub.f32 %v2231, %v2379
        %v2710 = vsub.f32 %v2232, %v2416
        %v2711 = vsub.f32 %v2233, %v2379
        %v2712 = vsub.f32 %v2234, %v2416
        %v2713 = vsub.f32 %v2235, %v2379
        %v2714 = vsub.f32 %v2236, %v2416
        %v2715 = vsub.f32 %v2237, %v2379
        %v2716 = vsub.f32 %v2238, %v2416
        %v2717 = vsub.f32 %v2239, %v2379
        %v2718 = vsub.f32 %v2240, %v2416
        %v2719 = vsub.f32 %v2241, %v2379
        %v2720 = vsub.f32 %v2242, %v2416
        %v2721 = vsub.f32 %v2243, %v2379
        %v2722 = vsub.f32 %v2244, %v2416
        %v2723 = vsub.f32 %v2245, %v2379
        %v2724 = vsub.f32 %v2246, %v2416
        %v2725 = vsub.f32 %v2247, %v2379
        %v2726 = vsub.f32 %v2248, %v2416
        %v2727 = vsub.f32 %v2249, %v2379
        %v2728 = vsub.f32 %v2250, %v2416
        %v2729 = vsub.f32 %v2251, %v2379
        %v2730 = vsub.f32 %v2252, %v2416
        %v2731 = vsub.f32 %v2253, %v2379
        %v2732 = vsub.f32 %v2254, %v2416
        %v2733 = vsub.f32 %v2255, %v2379
        %v2734 = vsub.f32 %v2256, %v2416
        %v2735 = vsub.f32 %v2257, %v2379
        %v2736 = vsub.f32 %v2258, %v2416
        %v2737 = vsub.f32 %v2259, %v2379
        %v2738 = vsub.f32 %v2260, %v2416
        %v2739 = vsub.f32 %v2261, %v2379
        %v2740 = vsub.f32 %v2262, %v2416
        %v2741 = vsub.f32 %v2263, %v2379
        %v2742 = vsub.f32 %v2264, %v2416
        %v2743 = vsub.f32 %v2265, %v2379
        %v2744 = vsub.f32 %v2266, %v2416
        %v2745 = vsub.f32 %v2267, %v2379
        %v2746 = vsub.f32 %v2268, %v2416
        %v2747 = vmul.f32 %v2683, 1.442695
        %v2748 = vpow.pop %v2747
        %v2749 = vmul.f32 %v2684, 1.442695
        %v2750 = vpow.pop %v2749
        %v2751 = vmul.f32 %v2685, 1.442695
        %v2752 = vpow.pop %v2751
        %v2753 = vmul.f32 %v2686, 1.442695
        %v2754 = vpow.pop %v2753
        %v2755 = vmul.f32 %v2687, 1.442695
        %v2756 = vpow.pop %v2755
        %v2757 = vmul.f32 %v2688, 1.442695
        %v2758 = vpow.pop %v2757
        %v2759 = vmul.f32 %v2689, 1.442695
        %v2760 = vpow.pop %v2759
        %v2761 = vmul.f32 %v2690, 1.442695
        %v2762 = vpow.pop %v2761
        %v2763 = vmul.f32 %v2691, 1.442695
        %v2764 = vpow.pop %v2763
        %v2765 = vmul.f32 %v2692, 1.442695
        %v2766 = vpow.pop %v2765
        %v2767 = vmul.f32 %v2693, 1.442695
        %v2768 = vpow.pop %v2767
        %v2769 = vmul.f32 %v2694, 1.442695
        %v2770 = vpow.pop %v2769
        %v2771 = vmul.f32 %v2695, 1.442695
        %v2772 = vpow.pop %v2771
        %v2773 = vmul.f32 %v2696, 1.442695
        %v2774 = vpow.pop %v2773
        %v2775 = vmul.f32 %v2697, 1.442695
        %v2776 = vpow.pop %v2775
        %v2777 = vmul.f32 %v2698, 1.442695
        %v2778 = vpow.pop %v2777
        %v2779 = vmul.f32 %v2699, 1.442695
        %v2780 = vpow.pop %v2779
        %v2781 = vmul.f32 %v2700, 1.442695
        %v2782 = vpow.pop %v2781
        %v2783 = vmul.f32 %v2701, 1.442695
        %v2784 = vpow.pop %v2783
        %v2785 = vmul.f32 %v2702, 1.442695
        %v2786 = vpow.pop %v2785
        %v2787 = vmul.f32 %v2703, 1.442695
        %v2788 = vpow.pop %v2787
        %v2789 = vmul.f32 %v2704, 1.442695
        %v2790 = vpow.pop %v2789
        %v2791 = vmul.f32 %v2705, 1.442695
        %v2792 = vpow.pop %v2791
        %v2793 = vmul.f32 %v2706, 1.442695
        %v2794 = vpow.pop %v2793
        %v2795 = vmul.f32 %v2707, 1.442695
        %v2796 = vpow.pop %v2795
        %v2797 = vmul.f32 %v2708, 1.442695
        %v2798 = vpow.pop %v2797
        %v2799 = vmul.f32 %v2709, 1.442695
        %v2800 = vpow.pop %v2799
        %v2801 = vmul.f32 %v2710, 1.442695
        %v2802 = vpow.pop %v2801
        %v2803 = vmul.f32 %v2711, 1.442695
        %v2804 = vpow.pop %v2803
        %v2805 = vmul.f32 %v2712, 1.442695
        %v2806 = vpow.pop %v2805
        %v2807 = vmul.f32 %v2713, 1.442695
        %v2808 = vpow.pop %v2807
        %v2809 = vmul.f32 %v2714, 1.442695
        %v2810 = vpow.pop %v2809
        %v2811 = vmul.f32 %v2715, 1.442695
        %v2812 = vpow.pop %v2811
        %v2813 = vmul.f32 %v2716, 1.442695
        %v2814 = vpow.pop %v2813
        %v2815 = vmul.f32 %v2717, 1.442695
        %v2816 = vpow.pop %v2815
        %v2817 = vmul.f32 %v2718, 1.442695
        %v2818 = vpow.pop %v2817
        %v2819 = vmul.f32 %v2719, 1.442695
        %v2820 = vpow.pop %v2819
        %v2821 = vmul.f32 %v2720, 1.442695
        %v2822 = vpow.pop %v2821
        %v2823 = vmul.f32 %v2721, 1.442695
        %v2824 = vpow.pop %v2823
        %v2825 = vmul.f32 %v2722, 1.442695
        %v2826 = vpow.pop %v2825
        %v2827 = vmul.f32 %v2723, 1.442695
        %v2828 = vpow.pop %v2827
        %v2829 = vmul.f32 %v2724, 1.442695
        %v2830 = vpow.pop %v2829
        %v2831 = vmul.f32 %v2725, 1.442695
        %v2832 = vpow.pop %v2831
        %v2833 = vmul.f32 %v2726, 1.442695
        %v2834 = vpow.pop %v2833
        %v2835 = vmul.f32 %v2727, 1.442695
        %v2836 = vpow.pop %v2835
        %v2837 = vmul.f32 %v2728, 1.442695
        %v2838 = vpow.pop %v2837
        %v2839 = vmul.f32 %v2729, 1.442695
        %v2840 = vpow.pop %v2839
        %v2841 = vmul.f32 %v2730, 1.442695
        %v2842 = vpow.pop %v2841
        %v2843 = vmul.f32 %v2731, 1.442695
        %v2844 = vpow.pop %v2843
        %v2845 = vmul.f32 %v2732, 1.442695
        %v2846 = vpow.pop %v2845
        %v2847 = vmul.f32 %v2733, 1.442695
        %v2848 = vpow.pop %v2847
        %v2849 = vmul.f32 %v2734, 1.442695
        %v2850 = vpow.pop %v2849
        %v2851 = vmul.f32 %v2735, 1.442695
        %v2852 = vpow.pop %v2851
        %v2853 = vmul.f32 %v2736, 1.442695
        %v2854 = vpow.pop %v2853
        %v2855 = vmul.f32 %v2737, 1.442695
        %v2856 = vpow.pop %v2855
        %v2857 = vmul.f32 %v2738, 1.442695
        %v2858 = vpow.pop %v2857
        %v2859 = vmul.f32 %v2739, 1.442695
        %v2860 = vpow.pop %v2859
        %v2861 = vmul.f32 %v2740, 1.442695
        %v2862 = vpow.pop %v2861
        %v2863 = vmul.f32 %v2741, 1.442695
        %v2864 = vpow.pop %v2863
        %v2865 = vmul.f32 %v2742, 1.442695
        %v2866 = vpow.pop %v2865
        %v2867 = vmul.f32 %v2743, 1.442695
        %v2868 = vpow.pop %v2867
        %v2869 = vmul.f32 %v2744, 1.442695
        %v2870 = vpow.pop %v2869
        %v2871 = vmul.f32 %v2745, 1.442695
        %v2872 = vpow.pop %v2871
        %v2873 = vmul.f32 %v2746, 1.442695
        %v2874 = vpow.pop %v2873
        %v2875 = vadd.f32 %v2748, %v2752
        %v2876 = vadd.f32 %v2875, %v2756
        %v2877 = vadd.f32 %v2876, %v2760
        %v2878 = vadd.f32 %v2877, %v2764
        %v2879 = vadd.f32 %v2878, %v2768
        %v2880 = vadd.f32 %v2879, %v2772
        %v2881 = vadd.f32 %v2880, %v2776
        %v2882 = vadd.f32 %v2881, %v2780
        %v2883 = vadd.f32 %v2882, %v2784
        %v2884 = vadd.f32 %v2883, %v2788
        %v2885 = vadd.f32 %v2884, %v2792
        %v2886 = vadd.f32 %v2885, %v2796
        %v2887 = vadd.f32 %v2886, %v2800
        %v2888 = vadd.f32 %v2887, %v2804
        %v2889 = vadd.f32 %v2888, %v2808
        %v2890 = vadd.f32 %v2889, %v2812
        %v2891 = vadd.f32 %v2890, %v2816
        %v2892 = vadd.f32 %v2891, %v2820
        %v2893 = vadd.f32 %v2892, %v2824
        %v2894 = vadd.f32 %v2893, %v2828
        %v2895 = vadd.f32 %v2894, %v2832
        %v2896 = vadd.f32 %v2895, %v2836
        %v2897 = vadd.f32 %v2896, %v2840
        %v2898 = vadd.f32 %v2897, %v2844
        %v2899 = vadd.f32 %v2898, %v2848
        %v2900 = vadd.f32 %v2899, %v2852
        %v2901 = vadd.f32 %v2900, %v2856
        %v2902 = vadd.f32 %v2901, %v2860
        %v2903 = vadd.f32 %v2902, %v2864
        %v2904 = vadd.f32 %v2903, %v2868
        %v2905 = vadd.f32 %v2904, %v2872
        %v2906 = vrot.slane %v2905, 4
        %v2907 = vadd.f32 %v2905, %v2906
        %v2908 = vrot.slane %v2907, 2
        %v2909 = vadd.f32 %v2907, %v2908
        %v2910 = vrot.slane %v2909, 1
        %v2911 = vadd.f32 %v2909, %v2910
        %v2912 = vadd.f32 %v2750, %v2754
        %v2913 = vadd.f32 %v2912, %v2758
        %v2914 = vadd.f32 %v2913, %v2762
        %v2915 = vadd.f32 %v2914, %v2766
        %v2916 = vadd.f32 %v2915, %v2770
        %v2917 = vadd.f32 %v2916, %v2774
        %v2918 = vadd.f32 %v2917, %v2778
        %v2919 = vadd.f32 %v2918, %v2782
        %v2920 = vadd.f32 %v2919, %v2786
        %v2921 = vadd.f32 %v2920, %v2790
        %v2922 = vadd.f32 %v2921, %v2794
        %v2923 = vadd.f32 %v2922, %v2798
        %v2924 = vadd.f32 %v2923, %v2802
        %v2925 = vadd.f32 %v2924, %v2806
        %v2926 = vadd.f32 %v2925, %v2810
        %v2927 = vadd.f32 %v2926, %v2814
        %v2928 = vadd.f32 %v2927, %v2818
        %v2929 = vadd.f32 %v2928, %v2822
        %v2930 = vadd.f32 %v2929, %v2826
        %v2931 = vadd.f32 %v2930, %v2830
        %v2932 = vadd.f32 %v2931, %v2834
        %v2933 = vadd.f32 %v2932, %v2838
        %v2934 = vadd.f32 %v2933, %v2842
        %v2935 = vadd.f32 %v2934, %v2846
        %v2936 = vadd.f32 %v2935, %v2850
        %v2937 = vadd.f32 %v2936, %v2854
        %v2938 = vadd.f32 %v2937, %v2858
        %v2939 = vadd.f32 %v2938, %v2862
        %v2940 = vadd.f32 %v2939, %v2866
        %v2941 = vadd.f32 %v2940, %v2870
        %v2942 = vadd.f32 %v2941, %v2874
        %v2943 = vrot.slane %v2942, 4
        %v2944 = vadd.f32 %v2942, %v2943
        %v2945 = vrot.slane %v2944, 2
        %v2946 = vadd.f32 %v2944, %v2945
        %v2947 = vrot.slane %v2946, 1
        %v2948 = vadd.f32 %v2946, %v2947
        %vm2949 = vcmask 1040384
        %v2950 = vsel %vm2949, %v2305, %v2645
        %v2951 = vsel %vm2949, %v2342, %v2682
        %vm2952 = vcmask 1041408
        %v2953 = vsel %vm2952, %v2950, %v2379
        %v2954 = vsel %vm2952, %v2951, %v2416
        %vm2955 = vcmask 1042432
        %v2956 = vsel %vm2955, %v2953, %v2911
        %v2957 = vsel %vm2955, %v2954, %v2948
        %v2960 = vcombine.low %v2956, %v2957
        %2962 = vst [vmem:[%s294] sm:$0xff] %v2960
        %s2963 = sand.u32 %s153, 1
        %s2964 = scalar_lea.sflag [#allocation7], %s2963
        %s2965 = sand.u32 %s153, 1
        %s2966 = smul.addr %s2965, 8
        %s2967 = scalar_lea.vmem [#allocation8], %s2966
        // Predicated region
        $region41: #{tpu_custom_call.1} parent=35 // pred_check
          %p2968 = pneg %p163
        $region42: #{tpu_custom_call.1} parent=35 // pred_check_branch
          %2970 = sbr.rel (%p2968) target = $region44
        $region43: #{tpu_custom_call.1} parent=35 // pred_region
          %s2972 = ssub.s32 128, 128
          %2973 = vsyncadd %s2964, %s2972
          %s2974 = smul.addr %s33, 2
          %s2975 = smul.addr %s2974, 64
          %s2976 = scalar_lea.hbm %s6, %s2975
          %s2978 = sshll.u32 %s2967, 4
          %s2979 = int_to_ptr.vmem [resolvable:$true] %s2978
          %2981 = dma.vmem_to_hbm [thread:$0]  %s2979, 128, %s2976, %s2964
        $region44: #{tpu_custom_call.1} parent=35 // pred_fallthru
          _
      $region36: #{tpu_custom_call.1} parent=5 // pred_fallthru
        _
      %p2982 = scmp.le.s32.totalorder 2, %s28
      // Predicated region
      $region45: #{tpu_custom_call.1} parent=5 // pred_check
        %p2983 = pneg %p2982
      $region46: #{tpu_custom_call.1} parent=5 // pred_check_branch
        %2985 = sbr.rel (%p2983) target = $region48
      $region47: #{tpu_custom_call.1} parent=5 // pred_region
        %s2986 = ssub.s32 %s28, 2
        // Predicated region
        $region49: #{tpu_custom_call.1} parent=47 // pred_check
          %p2987 = pneg %p169
        $region50: #{tpu_custom_call.1} parent=47 // pred_check_branch
          %2989 = sbr.rel (%p2987) target = $region52
        $region51: #{tpu_custom_call.1} parent=47 // pred_region
          %s2990 = sand.u32 %s154, 1
          %s2991 = scalar_lea.sflag [#allocation7], %s2990
          %s2992 = sand.u32 %s154, 1
          %s2993 = smul.addr %s2992, 8
          %s2994 = scalar_lea.vmem [#allocation8], %s2993
          %2995 = dma.done %s2991, 128
        $region52: #{tpu_custom_call.1} parent=47 // pred_fallthru
          _
      $region48: #{tpu_custom_call.1} parent=5 // pred_fallthru
        _
    $region6: #{tpu_custom_call.1} parent=1 // loop_footer
      %s32 = sadd.s32 1, %s28
    $region7: #{tpu_custom_call.1} parent=1 // loop_footer_branch
      %27 = sbr.rel target = $region3
    $region8: #{tpu_custom_call.1} parent=1 // loop_exit
      _
    %2996 = vsyncpa [#allocation6], 1
    %s2997 = scalar_lea.sflag [#allocation6], 1
    %2998 = vsyncpa %s2997, 1
    %2999 = vsyncpa [#allocation7], 1
    %s3000 = scalar_lea.sflag [#allocation7], 1
    %3001 = vsyncpa %s3000, 1

</llo_original>
